<compile_context>
chip_gen: v7x
topology: tpu7x:2x2x1
jax: 0.10.0
libtpu: 0.0.40
codegen_flags: <defaults>
</compile_context>

<pallas_src>
import jax
import jax.numpy as jnp
from jax.experimental import pallas as pl
from jax.experimental.pallas import tpu as pltpu


# Weights and matmul *inputs* in bf16 (MXU native); biases, accumulation, bias adds,
# tanh and outputs stay float32.
PARAM_DTYPE = jnp.bfloat16

_LANE = 128   # TPU lane width
_TOK = 100    # shrink_tokens output width == grow_tokens input width (fixed by module)


def _round_up(x, m):
    return (x + m - 1) // m * m


# ------------------------------ fused Pallas kernel ------------------------------

def _fused_mmd_vae_kernel(x3_ref, xf_ref, wenc_ref, benc_ref,
                          wdl_ref, bdl_ref, w2_ref, b2_ref,
                          dec_ref, lat_ref):
    """One grid step = one batch block (BB elements). Three MXU matmuls, no loops.

    x3_ref  : (BB, S, D)      hidden, token-major view (decoder LHS)
    xf_ref  : (BB, 1, S*D)    hidden, flattened view (encoder LHS)
    wenc_ref: (S*D, L)        shrink_tokens ∘ shrink_sequence fold   (bf16)
    benc_ref: (1, L)          folded encoder bias                    (f32)
    wdl_ref : (D, NDEC)       decode_latent, cols padded 10S -> 128  (bf16)
    bdl_ref : (1, NDEC)       decode_latent bias, zero-padded        (f32)
    w2_ref  : (NDEC, C*D)     grow_sequence ∘ grow_tokens fold       (bf16)
    b2_ref  : (1, C*D)        folded decoder bias                    (f32)
    dec_ref : (BB, S, C*D)    decoder output, "wide" layout (free reshape in wrapper)
    lat_ref : (BB, 1, L)      encoder latent
    """
    f32 = jnp.float32
    BB, S, D = x3_ref.shape

    # --- encoder: latent = tanh(x_flat @ W_enc + b_enc), one (BB, S*D)x(S*D, L) pass
    xe = xf_ref[:, 0, :]                                                  # (BB, S*D)
    lat = jnp.dot(xe, wenc_ref[...], preferred_element_type=f32) + benc_ref[...]
    lat_ref[:, 0, :] = jnp.tanh(lat).astype(lat_ref.dtype)

    # --- decoder: decode_latent, then the grow_sequence∘grow_tokens fold.
    # (BB, S, D) -> (BB*S, D) only collapses leading dims -> layout no-op.
    x2d = x3_ref[...].reshape(BB * S, D)
    d1 = jnp.dot(x2d, wdl_ref[...], preferred_element_type=f32) + bdl_ref[...]
    wide = jnp.dot(d1.astype(w2_ref.dtype), w2_ref[...],
                   preferred_element_type=f32) + b2_ref[...]              # (BB*S, C*D)
    dec_ref[...] = wide.reshape(BB, S, -1).astype(dec_ref.dtype)


# -------------------------------- parameter setup --------------------------------

def _init_linear(key, in_f, out_f):
    """Deterministic init mimicking torch.nn.Linear (uniform ±1/sqrt(in_f)).

    Returned weight is (in_f, out_f), i.e. the transpose of PyTorch's storage.
    """
    kw, kb = jax.random.split(key)
    bound = 1.0 / (in_f ** 0.5)
    w = jax.random.uniform(kw, (in_f, out_f), jnp.float32, -bound, bound)
    b = jax.random.uniform(kb, (out_f,), jnp.float32, -bound, bound)
    return w, b


def init_mmd_vae_params(key, dim_model, seq_size, latent_size):
    keys = jax.random.split(key, 5)
    return {
        # LatentEncoderLargeTanh_1kLatent
        "shrink_tokens":   _init_linear(keys[0], dim_model, _TOK),
        "shrink_sequence": _init_linear(keys[1], _TOK * seq_size, latent_size),
        # LatentDecoderLargeT5NormFF
        "decode_latent":   _init_linear(keys[2], latent_size, 10 * seq_size),
        "grow_sequence":   _init_linear(keys[3], 10 * seq_size, _TOK * seq_size),
        "grow_tokens":     _init_linear(keys[4], _TOK, dim_model),
    }


def pack_params(params, dim_model, seq_size, latent_size, dtype=PARAM_DTYPE):
    """Fold / pad the logical weights into the three-matmul layout the kernel uses.

    * Encoder fold: W_enc[s*D:(s+1)*D, :] = w_st @ w_ss[s*100:(s+1)*100, :],
      b_enc = b_ss + sum_s b_st @ w_ss_chunk[s]. Encoder = tanh(x_flat @ W_enc + b_enc).
    * decode_latent output columns are zero-padded 10S -> NDEC (=128) lanes.
    * Decoder fold: W2[:, c*D:(c+1)*D] = w_gs[:, c*100:(c+1)*100] @ w_gt (rows padded
      10S -> NDEC with zeros), B2[0, c*D+d] = b_gs[c*100:(c+1)*100] @ w_gt[:, d] + b_gt[d].
      The product (BB*S, C*D) is already in (token, chunk, D) order, so reshaping to
      (B, S*C, D) == PyTorch's `latent.view(batch, -1, 100)` row order is free.
    Folds are computed once in f32 (HIGHEST precision); weights then cast to bf16,
    biases stay f32 (added to the f32 accumulator).
    """
    S, D, L = seq_size, dim_model, latent_size
    n_dl = 10 * S
    NDEC = _round_up(n_dl, _LANE)       # 128 for S=8
    hp = jax.lax.Precision.HIGHEST

    w_st, b_st = params["shrink_tokens"]    # (D, 100), (100,)
    w_ss, b_ss = params["shrink_sequence"]  # (100*S, L), (L,)
    w_dl, b_dl = params["decode_latent"]    # (L, 10*S), (10*S,)
    w_gs, b_gs = params["grow_sequence"]    # (10*S, 100*S), (100*S,)
    w_gt, b_gt = params["grow_tokens"]      # (100, D), (D,)

    # --- encoder fold ---
    w_ss3 = w_ss.reshape(S, _TOK, L)
    W_enc = jnp.einsum("dj,sjl->sdl", w_st, w_ss3, precision=hp).reshape(S * D, L)
    b_enc = (b_ss + jnp.einsum("j,sjl->l", b_st, w_ss3, precision=hp)).reshape(1, L)

    # --- decode_latent (padded 10S -> NDEC lanes; module applies it to `hidden`, which
    # is only shape-valid because dim_model == latent_size — original-module quirk) ---
    W_dl = jnp.zeros((L, NDEC), jnp.float32).at[:, :n_dl].set(w_dl)
    b_dlp = jnp.zeros((1, NDEC), jnp.float32).at[0, :n_dl].set(b_dl)

    # --- grow_sequence ∘ grow_tokens fold (C = S chunks of width D) ---
    w_gs3 = w_gs.reshape(n_dl, S, _TOK)
    W2 = jnp.zeros((NDEC, S * D), jnp.float32)
    W2 = W2.at[:n_dl, :].set(
        jnp.einsum("icj,jd->icd", w_gs3, w_gt, precision=hp).reshape(n_dl, S * D))
    B2 = (jnp.einsum("cj,jd->cd", b_gs.reshape(S, _TOK), w_gt, precision=hp)
          + b_gt[None, :]).reshape(1, S * D)

    cast = lambda a: a.astype(dtype)
    return {"W_enc": cast(W_enc), "b_enc": b_enc.astype(jnp.float32),
            "W_dl": cast(W_dl), "b_dl": b_dlp.astype(jnp.float32),
            "W2": cast(W2), "B2": B2.astype(jnp.float32)}


# ---------------------------------- forward pass ----------------------------------

def mmd_vae_forward(packed, hidden, batch_block=None):
    """hidden: (B, S, dim_model) float32. Returns (decoded, 0, latent).

    batch_block (BB): batch elements per grid step. Default ceil(B/2) keeps >=2
    "parallel" grid steps so both v7x TensorCores get work; pass batch_block=B for a
    single big step on single-TC v5e/v6e.
    """
    B, S, D = hidden.shape
    L = packed["W_enc"].shape[1]
    NDEC = packed["W_dl"].shape[1]
    CD = packed["W2"].shape[1]          # = C * D = S * D
    dtype = packed["W_enc"].dtype

    BB = batch_block if batch_block is not None else max(1, -(-B // 2))
    assert B % BB == 0, "TODO(synk): pad the batch to a multiple of batch_block"
    nb = B // BB

    # Two free (row-major-compatible) views of the same input; the 2nd copy costs
    # only B*S*D*2 bytes of extra DMA and removes any in-kernel lane<->sublane relayout.
    x3 = hidden.astype(dtype)                           # (B, S, D)    decoder LHS
    xf = hidden.reshape(B, 1, S * D).astype(dtype)      # (B, 1, S*D)  encoder LHS

    flops = 2 * B * (S * D * L + S * D * NDEC + S * NDEC * CD)
    bytes_accessed = (x3.size * x3.dtype.itemsize + xf.size * xf.dtype.itemsize
                      + sum(v.size * v.dtype.itemsize for v in packed.values())
                      + (B * S * CD + B * L) * 4)

    grid_spec = pltpu.PrefetchScalarGridSpec(
        num_scalar_prefetch=0,
        grid=(nb,),
        in_specs=[
            pl.BlockSpec((BB, S, D), lambda i: (i, 0, 0)),
            pl.BlockSpec((BB, 1, S * D), lambda i: (i, 0, 0)),
            # Constant-index weights/biases: same block every step => no re-DMA.
            pl.BlockSpec(packed["W_enc"].shape, lambda i: (0, 0)),
            pl.BlockSpec(packed["b_enc"].shape, lambda i: (0, 0)),
            pl.BlockSpec(packed["W_dl"].shape, lambda i: (0, 0)),
            pl.BlockSpec(packed["b_dl"].shape, lambda i: (0, 0)),
            pl.BlockSpec(packed["W2"].shape, lambda i: (0, 0)),
            pl.BlockSpec(packed["B2"].shape, lambda i: (0, 0)),
        ],
        out_specs=(
            pl.BlockSpec((BB, S, CD), lambda i: (i, 0, 0)),   # decoder "wide" output
            pl.BlockSpec((BB, 1, L), lambda i: (i, 0, 0)),    # latent
        ),
    )

    dec_wide, lat3 = pl.pallas_call(
        _fused_mmd_vae_kernel,
        out_shape=(jax.ShapeDtypeStruct((B, S, CD), jnp.float32),
                   jax.ShapeDtypeStruct((B, 1, L), jnp.float32)),
        grid_spec=grid_spec,
        compiler_params=pltpu.CompilerParams(
            dimension_semantics=("parallel",),
            vmem_limit_bytes=32 * 1024 * 1024),
        cost_estimate=pl.CostEstimate(flops=flops, transcendentals=B * L,
                                      bytes_accessed=bytes_accessed),
    )(x3, xf, packed["W_enc"], packed["b_enc"], packed["W_dl"], packed["b_dl"],
      packed["W2"], packed["B2"])

    # (B, S, C*D) -> (B, S*C, D): row-major compatible => pure metadata reshape
    # (no transpose, no data movement); row = s*C + c matches PyTorch's
    # `latent.view(batch, -1, 100)`.
    dec = dec_wide.reshape(B, -1, D)
    latent = lat3.reshape(B, L)

    # TODO(synk): latent_predictor is None here; the original forward then has no
    # `return` (evaluates `(hidden, torch.tensor(0))` and returns None). We return the
    # computed (decoded, 0, latent) tuple so the kernel outputs are observable.
    return dec, jnp.array(0, jnp.int32), latent


# ----------------------------- pure-JAX reference ---------------------------------

def mmd_vae_reference(params, hidden):
    """Unfused float32 reference (HIGHEST matmul precision) for correctness checking."""
    B, S, D = hidden.shape
    hp = jax.lax.Precision.HIGHEST
    w_st, b_st = params["shrink_tokens"]
    w_ss, b_ss = params["shrink_sequence"]
    w_dl, b_dl = params["decode_latent"]
    w_gs, b_gs = params["grow_sequence"]
    w_gt, b_gt = params["grow_tokens"]

    enc = jnp.dot(hidden, w_st, precision=hp) + b_st                      # (B, S, 100)
    latent = jnp.tanh(jnp.dot(enc.reshape(B, -1), w_ss, precision=hp) + b_ss)

    d = jnp.dot(hidden, w_dl, precision=hp) + b_dl                        # (B, S, 10S)
    d = jnp.dot(d, w_gs, precision=hp) + b_gs                             # (B, S, 100S)
    d = d.reshape(B, -1, _TOK)                                            # (B, S*S, 100)
    d = jnp.dot(d, w_gt, precision=hp) + b_gt                             # (B, S*S, D)
    return d, latent


# ---------------------------------------- main ------------------------------------

if __name__ == "__main__":
    dim_model = 128     # encoder asserts dim_m > 100
    seq_size = 8
    latent_size = 128   # == dim_model so decoder(hidden) is shape-valid (module quirk)
    batch = 2

    key = jax.random.PRNGKey(0)
    pkey, xkey = jax.random.split(key)

    params = init_mmd_vae_params(pkey, dim_model, seq_size, latent_size)
    packed = pack_params(params, dim_model, seq_size, latent_size)
    hidden = jax.random.normal(xkey, (batch, seq_size, dim_model), jnp.float32)

    fwd = jax.jit(mmd_vae_forward)
    dec, zero, latent = fwd(packed, hidden)
    jax.block_until_ready((dec, zero, latent))

    assert dec.shape == (batch, seq_size * seq_size, dim_model), dec.shape
    assert latent.shape == (batch, latent_size), latent.shape
    assert int(zero) == 0

    dec_expect, latent_expect = mmd_vae_reference(params, hidden)
    assert bool(jnp.allclose(dec, dec_expect, rtol=2e-2, atol=2e-2)), \
        float(jnp.max(jnp.abs(dec - dec_expect)))
    assert bool(jnp.allclose(latent, latent_expect, rtol=2e-2, atol=2e-2)), \
        float(jnp.max(jnp.abs(latent - latent_expect)))

    print("KERNEL_OK")
</pallas_src>

<mosaic_0001>
module attributes {stable_mosaic.version = 11 : i64} {
  func.func @_fused_mmd_vae_kernel(%arg0: i32, %arg1: memref<1x8x128xbf16, #tpu.memory_space<vmem>>, %arg2: memref<1x1x1024xbf16, #tpu.memory_space<vmem>>, %arg3: memref<1024x128xbf16, #tpu.memory_space<vmem>>, %arg4: memref<1x128xf32, #tpu.memory_space<vmem>>, %arg5: memref<128x128xbf16, #tpu.memory_space<vmem>>, %arg6: memref<1x128xf32, #tpu.memory_space<vmem>>, %arg7: memref<128x1024xbf16, #tpu.memory_space<vmem>>, %arg8: memref<1x1024xf32, #tpu.memory_space<vmem>>, %arg9: memref<1x8x1024xf32, #tpu.memory_space<vmem>>, %arg10: memref<1x1x128xf32, #tpu.memory_space<vmem>>) attributes {dimension_semantics = [#tpu.dimension_semantics<parallel>], iteration_bounds = array<i64: 2>, scalar_prefetch = 0 : i64, scratch_operands = 0 : i64, tpu.core_type = #tpu.core_type<tc>, window_params = [{transform_indices = @transform_0, window_bounds = array<i64: 1, 8, 128>}, {transform_indices = @transform_1, window_bounds = array<i64: 1, 1, 1024>}, {pipeline_mode = #tpu.pipeline_mode<synchronous>, transform_indices = @transform_2, window_bounds = array<i64: 1024, 128>}, {pipeline_mode = #tpu.pipeline_mode<synchronous>, transform_indices = @transform_3, window_bounds = array<i64: 1, 128>}, {pipeline_mode = #tpu.pipeline_mode<synchronous>, transform_indices = @transform_4, window_bounds = array<i64: 128, 128>}, {pipeline_mode = #tpu.pipeline_mode<synchronous>, transform_indices = @transform_5, window_bounds = array<i64: 1, 128>}, {pipeline_mode = #tpu.pipeline_mode<synchronous>, transform_indices = @transform_6, window_bounds = array<i64: 128, 1024>}, {pipeline_mode = #tpu.pipeline_mode<synchronous>, transform_indices = @transform_7, window_bounds = array<i64: 1, 1024>}, {transform_indices = @transform_8, window_bounds = array<i64: 1, 8, 1024>}, {transform_indices = @transform_9, window_bounds = array<i64: 1, 1, 128>}]} {
    %c0 = arith.constant 0 : index
    %c0_0 = arith.constant 0 : index
    %c0_1 = arith.constant 0 : index
    %0 = vector.load %arg2[%c0, %c0_0, %c0_1] : memref<1x1x1024xbf16, #tpu.memory_space<vmem>>, vector<1x1x1024xbf16>
    %1 = vector.shape_cast %0 : vector<1x1x1024xbf16> to vector<1x1024xbf16>
    %c0_2 = arith.constant 0 : index
    %c0_3 = arith.constant 0 : index
    %2 = vector.load %arg3[%c0_2, %c0_3] : memref<1024x128xbf16, #tpu.memory_space<vmem>>, vector<1024x128xbf16>
    %cst = arith.constant dense<0.000000e+00> : vector<1x128xf32>
    %3 = tpu.matmul %1, %2, %cst {dimension_numbers = #tpu.dot_dimension_numbers<[1], [0], [0], [1], [0, 0, 1, 1], [], []>} : vector<1x1024xbf16>, vector<1024x128xbf16>, vector<1x128xf32> -> vector<1x128xf32>
    %c0_4 = arith.constant 0 : index
    %c0_5 = arith.constant 0 : index
    %4 = vector.load %arg4[%c0_4, %c0_5] : memref<1x128xf32, #tpu.memory_space<vmem>>, vector<1x128xf32>
    %5 = arith.addf %3, %4 : vector<1x128xf32>
    %6 = math.tanh %5 : vector<1x128xf32>
    %c0_6 = arith.constant 0 : index
    %c0_7 = arith.constant 0 : index
    %c0_8 = arith.constant 0 : index
    %7 = vector.load %arg10[%c0_6, %c0_7, %c0_8] : memref<1x1x128xf32, #tpu.memory_space<vmem>>, vector<1x1x128xf32>
    %8 = vector.shape_cast %7 : vector<1x1x128xf32> to vector<1x128xf32>
    %9 = vector.shape_cast %6 : vector<1x128xf32> to vector<1x1x128xf32>
    tpu.vector_store %arg10[%c0_6, %c0_7, %c0_8], %9 {strides = array<i32>} : memref<1x1x128xf32, #tpu.memory_space<vmem>>, vector<1x1x128xf32>,
    %c0_9 = arith.constant 0 : index
    %c0_10 = arith.constant 0 : index
    %c0_11 = arith.constant 0 : index
    %10 = vector.load %arg1[%c0_9, %c0_10, %c0_11] : memref<1x8x128xbf16, #tpu.memory_space<vmem>>, vector<1x8x128xbf16>
    %11 = vector.shape_cast %10 : vector<1x8x128xbf16> to vector<8x128xbf16>
    %c0_12 = arith.constant 0 : index
    %c0_13 = arith.constant 0 : index
    %12 = vector.load %arg5[%c0_12, %c0_13] : memref<128x128xbf16, #tpu.memory_space<vmem>>, vector<128x128xbf16>
    %cst_14 = arith.constant dense<0.000000e+00> : vector<8x128xf32>
    %13 = tpu.matmul %11, %12, %cst_14 {dimension_numbers = #tpu.dot_dimension_numbers<[1], [0], [0], [1], [0, 0, 1, 1], [], []>} : vector<8x128xbf16>, vector<128x128xbf16>, vector<8x128xf32> -> vector<8x128xf32>
    %c0_15 = arith.constant 0 : index
    %c0_16 = arith.constant 0 : index
    %14 = vector.load %arg6[%c0_15, %c0_16] : memref<1x128xf32, #tpu.memory_space<vmem>>, vector<1x128xf32>
    %15 = vector.broadcast %14 : vector<1x128xf32> to vector<8x128xf32>
    %16 = arith.addf %13, %15 : vector<8x128xf32>
    %17 = arith.truncf %16 : vector<8x128xf32> to vector<8x128xbf16>
    %c0_17 = arith.constant 0 : index
    %c0_18 = arith.constant 0 : index
    %18 = vector.load %arg7[%c0_17, %c0_18] : memref<128x1024xbf16, #tpu.memory_space<vmem>>, vector<128x1024xbf16>
    %cst_19 = arith.constant dense<0.000000e+00> : vector<8x1024xf32>
    %19 = tpu.matmul %17, %18, %cst_19 {dimension_numbers = #tpu.dot_dimension_numbers<[1], [0], [0], [1], [0, 0, 1, 1], [], []>} : vector<8x128xbf16>, vector<128x1024xbf16>, vector<8x1024xf32> -> vector<8x1024xf32>
    %c0_20 = arith.constant 0 : index
    %c0_21 = arith.constant 0 : index
    %20 = vector.load %arg8[%c0_20, %c0_21] : memref<1x1024xf32, #tpu.memory_space<vmem>>, vector<1x1024xf32>
    %21 = vector.broadcast %20 : vector<1x1024xf32> to vector<8x1024xf32>
    %22 = arith.addf %19, %21 : vector<8x1024xf32>
    %23 = vector.shape_cast %22 : vector<8x1024xf32> to vector<1x8x1024xf32>
    %c0_22 = arith.constant 0 : index
    %c0_23 = arith.constant 0 : index
    %c0_24 = arith.constant 0 : index
    %24 = vector.load %arg9[%c0_22, %c0_23, %c0_24] : memref<1x8x1024xf32, #tpu.memory_space<vmem>>, vector<1x8x1024xf32>
    tpu.vector_store %arg9[%c0_22, %c0_23, %c0_24], %23 {strides = array<i32>} : memref<1x8x1024xf32, #tpu.memory_space<vmem>>, vector<1x8x1024xf32>,
    return
  }
  func.func @transform_0(%arg0: i32) -> (i32, i32, i32) {
    %c0_i32 = arith.constant 0 : i32
    %c0_i32_0 = arith.constant 0 : i32
    %c0_i32_1 = arith.constant 0 : i32
    return %arg0, %c0_i32, %c0_i32_0 : i32, i32, i32
  }
  func.func @transform_1(%arg0: i32) -> (i32, i32, i32) {
    %c0_i32 = arith.constant 0 : i32
    %c0_i32_0 = arith.constant 0 : i32
    %c0_i32_1 = arith.constant 0 : i32
    return %arg0, %c0_i32, %c0_i32_0 : i32, i32, i32
  }
  func.func @transform_2(%arg0: i32) -> (i32, i32) {
    %c0_i32 = arith.constant 0 : i32
    %c0_i32_0 = arith.constant 0 : i32
    %c0_i32_1 = arith.constant 0 : i32
    return %c0_i32, %c0_i32_0 : i32, i32
  }
  func.func @transform_3(%arg0: i32) -> (i32, i32) {
    %c0_i32 = arith.constant 0 : i32
    %c0_i32_0 = arith.constant 0 : i32
    %c0_i32_1 = arith.constant 0 : i32
    return %c0_i32, %c0_i32_0 : i32, i32
  }
  func.func @transform_4(%arg0: i32) -> (i32, i32) {
    %c0_i32 = arith.constant 0 : i32
    %c0_i32_0 = arith.constant 0 : i32
    %c0_i32_1 = arith.constant 0 : i32
    return %c0_i32, %c0_i32_0 : i32, i32
  }
  func.func @transform_5(%arg0: i32) -> (i32, i32) {
    %c0_i32 = arith.constant 0 : i32
    %c0_i32_0 = arith.constant 0 : i32
    %c0_i32_1 = arith.constant 0 : i32
    return %c0_i32, %c0_i32_0 : i32, i32
  }
  func.func @transform_6(%arg0: i32) -> (i32, i32) {
    %c0_i32 = arith.constant 0 : i32
    %c0_i32_0 = arith.constant 0 : i32
    %c0_i32_1 = arith.constant 0 : i32
    return %c0_i32, %c0_i32_0 : i32, i32
  }
  func.func @transform_7(%arg0: i32) -> (i32, i32) {
    %c0_i32 = arith.constant 0 : i32
    %c0_i32_0 = arith.constant 0 : i32
    %c0_i32_1 = arith.constant 0 : i32
    return %c0_i32, %c0_i32_0 : i32, i32
  }
  func.func @transform_8(%arg0: i32) -> (i32, i32, i32) {
    %c0_i32 = arith.constant 0 : i32
    %c0_i32_0 = arith.constant 0 : i32
    %c0_i32_1 = arith.constant 0 : i32
    return %arg0, %c0_i32, %c0_i32_0 : i32, i32, i32
  }
  func.func @transform_9(%arg0: i32) -> (i32, i32, i32) {
    %c0_i32 = arith.constant 0 : i32
    %c0_i32_0 = arith.constant 0 : i32
    %c0_i32_1 = arith.constant 0 : i32
    return %arg0, %c0_i32, %c0_i32_0 : i32, i32, i32
  }
}

</mosaic_0001>

<llo_original>
// kernel: mmd_vae_forward.1
$region0: #{mmd_vae_forward.1}
  #allocation0 [shape = 'u32[]', space=smem, size = 0x4, offset = 0x4, fixed_abs, tag = 'smem constant byte address 0x4 - core index']
  #allocation1 [shape = 'u32[144,128]{1,0:T(1,128)}', space=vmem, size = 0x12000, scoped, tag = 'internal scratch']
  %s0 = inlined_call_operand.vmem [shape: bf16[2,8,128], index: 0, kind: input, shape index: {}]
  %s1 = inlined_call_operand.vmem [shape: bf16[2,1,1024], index: 1, kind: input, shape index: {}]
  %s2 = inlined_call_operand.hbm [shape: bf16[1024,128], index: 2, kind: input, shape index: {}]
  %s3 = inlined_call_operand.vmem [shape: f32[1,128], index: 3, kind: input, shape index: {}]
  %s4 = inlined_call_operand.hbm [shape: bf16[128,128], index: 4, kind: input, shape index: {}]
  %s5 = inlined_call_operand.vmem [shape: f32[1,128], index: 5, kind: input, shape index: {}]
  %s6 = inlined_call_operand.hbm [shape: bf16[128,1024], index: 6, kind: input, shape index: {}]
  %s7 = inlined_call_operand.vmem [shape: f32[1,1024], index: 7, kind: input, shape index: {}]
  %s8 = inlined_call_operand.vmem [shape: f32[2,8,1024], index: 8, kind: output, shape index: {0}]
  %s9 = inlined_call_operand.hbm [shape: f32[2,1,128], index: 9, kind: output, shape index: {1}]
  %10 = xla_tuple %s8, %s9
  %s11 = sld [smem:[#allocation0]]
  $region85: #{mmd_vae_forward.1} parent=0
    _
  %s13 = ssub.s32 1, %s11
  %s14 = scalar_select 0, %s13, %s11
  $region1: #{mmd_vae_forward.1} parent=0
    #allocation2 [shape = 'u8[262144]{0}', space=vmem, size = 0x40000, scoped, tag = 'input window, operand 2, single buffered']
    #allocation3 [shape = 's32[2]{0}', space=sflag, size = 0x8, scoped, tag = 'scoped memory for mmd_vae_forward.1']
    #allocation4 [shape = 's32[2]{0}', space=sflag, size = 0x8, scoped, tag = 'scoped memory for mmd_vae_forward.1']
    #allocation5 [shape = 'u8[32768]{0}', space=vmem, size = 0x8000, scoped, tag = 'input window, operand 4, single buffered']
    #allocation6 [shape = 's32[1]{0}', space=sflag, size = 0x4, scoped, tag = 'scoped memory for mmd_vae_forward.1']
    #allocation7 [shape = 'u8[262144]{0}', space=vmem, size = 0x40000, scoped, tag = 'input window, operand 6, single buffered']
    #allocation8 [shape = 'u8[1024]{0}', space=vmem, size = 0x400, scoped, tag = 'output window, operand 1']
    %15 = vsyncpa [#allocation3], 0
    %16 = vsyncpa [#allocation6], 0
    %17 = vsyncpa [#allocation4], 0
    %s18 = scalar_lea.sflag [#allocation4], 1
    %19 = vsyncpa %s18, 0
    loop: start=0, step=1, limit=4
    $region2: #{mmd_vae_forward.1} parent=1 // loop_pre_header
      _
    $region3: #{mmd_vae_forward.1} parent=1 // loop_header
      %s21 = sphi 0, %s25
      %p22 = scmp.ge.s32.totalorder %s21, 4
      %s31 = sphi 0, %s33
      %s34 = sphi 0, %s31
      %s35 = sphi 0, %s34
      %s51 = sphi 0, %s35
      %s57 = sphi 0, %s59
      %s60 = sphi 0, %s57
      %s61 = sphi 0, %s60
      %s77 = sphi 0, %s61
      %s81 = sphi 0, %s81
      %s83 = sphi 0, %s81
      %s84 = sphi 0, %s83
      %s98 = sphi 0, %s84
      %s102 = sphi 0, %s102
      %s104 = sphi 0, %s102
      %s105 = sphi 0, %s104
      %s119 = sphi 0, %s105
      %s123 = sphi 0, %s123
      %s125 = sphi 0, %s123
      %s126 = sphi 0, %s125
      %s140 = sphi 0, %s126
      %s144 = sphi 0, %s144
      %s146 = sphi 0, %s144
      %s147 = sphi 0, %s146
      %s161 = sphi 0, %s147
      %s165 = sphi 0, %s165
      %s167 = sphi 0, %s165
      %s168 = sphi 0, %s167
      %s182 = sphi 0, %s168
      %s186 = sphi 0, %s186
      %s188 = sphi 0, %s186
      %s189 = sphi 0, %s188
      %s203 = sphi 0, %s189
      %s209 = sphi 0, %s211
      %s212 = sphi 0, %s209
      %s213 = sphi 0, %s212
      %s229 = sphi 0, %s213
      %s235 = sphi 0, %s237
      %s238 = sphi 0, %s235
      %s239 = sphi 0, %s238
      %s255 = sphi 0, %s239
    $region4: #{mmd_vae_forward.1} parent=1 // loop_header_branch
      %24 = sbr.rel (%p22) target = $region8
    $region5: #{mmd_vae_forward.1} parent=1 // loop_body
      %s26 = ssub.s32 %s21, 1
      %s27 = ssub.s32 %s21, 2
      %s28 = sadd.s32 %s21, 1
      %s29 = ssub.s32 %s21, %s28
      %p30 = scmp.eq.s32.totalorder %s29, 0
      %s32 = sadd.s32 %s31, 1
      %s33 = scalar_select %p30, %s31, %s32
      %p36 = pneg %p30
      %p37 = scmp.eq.s32.totalorder %s21, 1
      %p38 = por %p36, %p37
      %p39 = scmp.ne.s32.totalorder %s31, %s34
      %p40 = scmp.eq.s32.totalorder %s21, 0
      %p41 = por %p39, %p40
      %p42 = scmp.ne.s32.totalorder %s31, %s34
      %p43 = scmp.eq.s32.totalorder %s26, 1
      %p44 = por %p42, %p43
      %p45 = scmp.ne.s32.totalorder %s34, %s35
      %p46 = scmp.eq.s32.totalorder %s26, 0
      %p47 = por %p45, %p46
      %p48 = scmp.ne.s32.totalorder %s34, %s35
      %p49 = scmp.eq.s32.totalorder %s27, 1
      %p50 = por %p48, %p49
      %p52 = scmp.ne.s32.totalorder %s35, %s51
      %p53 = scmp.eq.s32.totalorder %s27, 0
      %p54 = por %p52, %p53
      %s55 = ssub.s32 %s21, %s28
      %p56 = scmp.eq.s32.totalorder %s55, 0
      %s58 = sadd.s32 %s57, 1
      %s59 = scalar_select %p56, %s57, %s58
      %p62 = pneg %p56
      %p63 = scmp.eq.s32.totalorder %s21, 1
      %p64 = por %p62, %p63
      %p65 = scmp.ne.s32.totalorder %s57, %s60
      %p66 = scmp.eq.s32.totalorder %s21, 0
      %p67 = por %p65, %p66
      %p68 = scmp.ne.s32.totalorder %s57, %s60
      %p69 = scmp.eq.s32.totalorder %s26, 1
      %p70 = por %p68, %p69
      %p71 = scmp.ne.s32.totalorder %s60, %s61
      %p72 = scmp.eq.s32.totalorder %s26, 0
      %p73 = por %p71, %p72
      %p74 = scmp.ne.s32.totalorder %s60, %s61
      %p75 = scmp.eq.s32.totalorder %s27, 1
      %p76 = por %p74, %p75
      %p78 = scmp.ne.s32.totalorder %s61, %s77
      %p79 = scmp.eq.s32.totalorder %s27, 0
      %p80 = por %p78, %p79
      %s82 = sadd.s32 %s81, 1
      %p85 = scmp.eq.s32.totalorder %s21, 1
      %p86 = scmp.ne.s32.totalorder %s81, %s83
      %p87 = scmp.eq.s32.totalorder %s21, 0
      %p88 = por %p86, %p87
      %p89 = scmp.ne.s32.totalorder %s81, %s83
      %p90 = scmp.eq.s32.totalorder %s26, 1
      %p91 = por %p89, %p90
      %p92 = scmp.ne.s32.totalorder %s83, %s84
      %p93 = scmp.eq.s32.totalorder %s26, 0
      %p94 = por %p92, %p93
      %p95 = scmp.ne.s32.totalorder %s83, %s84
      %p96 = scmp.eq.s32.totalorder %s27, 1
      %p97 = por %p95, %p96
      %p99 = scmp.ne.s32.totalorder %s84, %s98
      %p100 = scmp.eq.s32.totalorder %s27, 0
      %p101 = por %p99, %p100
      %s103 = sadd.s32 %s102, 1
      %p106 = scmp.eq.s32.totalorder %s21, 1
      %p107 = scmp.ne.s32.totalorder %s102, %s104
      %p108 = scmp.eq.s32.totalorder %s21, 0
      %p109 = por %p107, %p108
      %p110 = scmp.ne.s32.totalorder %s102, %s104
      %p111 = scmp.eq.s32.totalorder %s26, 1
      %p112 = por %p110, %p111
      %p113 = scmp.ne.s32.totalorder %s104, %s105
      %p114 = scmp.eq.s32.totalorder %s26, 0
      %p115 = por %p113, %p114
      %p116 = scmp.ne.s32.totalorder %s104, %s105
      %p117 = scmp.eq.s32.totalorder %s27, 1
      %p118 = por %p116, %p117
      %p120 = scmp.ne.s32.totalorder %s105, %s119
      %p121 = scmp.eq.s32.totalorder %s27, 0
      %p122 = por %p120, %p121
      %s124 = sadd.s32 %s123, 1
      %p127 = scmp.eq.s32.totalorder %s21, 1
      %p128 = scmp.ne.s32.totalorder %s123, %s125
      %p129 = scmp.eq.s32.totalorder %s21, 0
      %p130 = por %p128, %p129
      %p131 = scmp.ne.s32.totalorder %s123, %s125
      %p132 = scmp.eq.s32.totalorder %s26, 1
      %p133 = por %p131, %p132
      %p134 = scmp.ne.s32.totalorder %s125, %s126
      %p135 = scmp.eq.s32.totalorder %s26, 0
      %p136 = por %p134, %p135
      %p137 = scmp.ne.s32.totalorder %s125, %s126
      %p138 = scmp.eq.s32.totalorder %s27, 1
      %p139 = por %p137, %p138
      %p141 = scmp.ne.s32.totalorder %s126, %s140
      %p142 = scmp.eq.s32.totalorder %s27, 0
      %p143 = por %p141, %p142
      %s145 = sadd.s32 %s144, 1
      %p148 = scmp.eq.s32.totalorder %s21, 1
      %p149 = scmp.ne.s32.totalorder %s144, %s146
      %p150 = scmp.eq.s32.totalorder %s21, 0
      %p151 = por %p149, %p150
      %p152 = scmp.ne.s32.totalorder %s144, %s146
      %p153 = scmp.eq.s32.totalorder %s26, 1
      %p154 = por %p152, %p153
      %p155 = scmp.ne.s32.totalorder %s146, %s147
      %p156 = scmp.eq.s32.totalorder %s26, 0
      %p157 = por %p155, %p156
      %p158 = scmp.ne.s32.totalorder %s146, %s147
      %p159 = scmp.eq.s32.totalorder %s27, 1
      %p160 = por %p158, %p159
      %p162 = scmp.ne.s32.totalorder %s147, %s161
      %p163 = scmp.eq.s32.totalorder %s27, 0
      %p164 = por %p162, %p163
      %s166 = sadd.s32 %s165, 1
      %p169 = scmp.eq.s32.totalorder %s21, 1
      %p170 = scmp.ne.s32.totalorder %s165, %s167
      %p171 = scmp.eq.s32.totalorder %s21, 0
      %p172 = por %p170, %p171
      %p173 = scmp.ne.s32.totalorder %s165, %s167
      %p174 = scmp.eq.s32.totalorder %s26, 1
      %p175 = por %p173, %p174
      %p176 = scmp.ne.s32.totalorder %s167, %s168
      %p177 = scmp.eq.s32.totalorder %s26, 0
      %p178 = por %p176, %p177
      %p179 = scmp.ne.s32.totalorder %s167, %s168
      %p180 = scmp.eq.s32.totalorder %s27, 1
      %p181 = por %p179, %p180
      %p183 = scmp.ne.s32.totalorder %s168, %s182
      %p184 = scmp.eq.s32.totalorder %s27, 0
      %p185 = por %p183, %p184
      %s187 = sadd.s32 %s186, 1
      %p190 = scmp.eq.s32.totalorder %s21, 1
      %p191 = scmp.ne.s32.totalorder %s186, %s188
      %p192 = scmp.eq.s32.totalorder %s21, 0
      %p193 = por %p191, %p192
      %p194 = scmp.ne.s32.totalorder %s186, %s188
      %p195 = scmp.eq.s32.totalorder %s26, 1
      %p196 = por %p194, %p195
      %p197 = scmp.ne.s32.totalorder %s188, %s189
      %p198 = scmp.eq.s32.totalorder %s26, 0
      %p199 = por %p197, %p198
      %p200 = scmp.ne.s32.totalorder %s188, %s189
      %p201 = scmp.eq.s32.totalorder %s27, 1
      %p202 = por %p200, %p201
      %p204 = scmp.ne.s32.totalorder %s189, %s203
      %p205 = scmp.eq.s32.totalorder %s27, 0
      %p206 = por %p204, %p205
      %s207 = ssub.s32 %s21, %s28
      %p208 = scmp.eq.s32.totalorder %s207, 0
      %s210 = sadd.s32 %s209, 1
      %s211 = scalar_select %p208, %s209, %s210
      %p214 = pneg %p208
      %p215 = scmp.eq.s32.totalorder %s21, 1
      %p216 = por %p214, %p215
      %p217 = scmp.ne.s32.totalorder %s209, %s212
      %p218 = scmp.eq.s32.totalorder %s21, 0
      %p219 = por %p217, %p218
      %p220 = scmp.ne.s32.totalorder %s209, %s212
      %p221 = scmp.eq.s32.totalorder %s26, 1
      %p222 = por %p220, %p221
      %p223 = scmp.ne.s32.totalorder %s212, %s213
      %p224 = scmp.eq.s32.totalorder %s26, 0
      %p225 = por %p223, %p224
      %p226 = scmp.ne.s32.totalorder %s212, %s213
      %p227 = scmp.eq.s32.totalorder %s27, 1
      %p228 = por %p226, %p227
      %p230 = scmp.ne.s32.totalorder %s213, %s229
      %p231 = scmp.eq.s32.totalorder %s27, 0
      %p232 = por %p230, %p231
      %s233 = ssub.s32 %s21, %s28
      %p234 = scmp.eq.s32.totalorder %s233, 0
      %s236 = sadd.s32 %s235, 1
      %s237 = scalar_select %p234, %s235, %s236
      %p240 = pneg %p234
      %p241 = scmp.eq.s32.totalorder %s21, 1
      %p242 = por %p240, %p241
      %p243 = scmp.ne.s32.totalorder %s235, %s238
      %p244 = scmp.eq.s32.totalorder %s21, 0
      %p245 = por %p243, %p244
      %p246 = scmp.ne.s32.totalorder %s235, %s238
      %p247 = scmp.eq.s32.totalorder %s26, 1
      %p248 = por %p246, %p247
      %p249 = scmp.ne.s32.totalorder %s238, %s239
      %p250 = scmp.eq.s32.totalorder %s26, 0
      %p251 = por %p249, %p250
      %p252 = scmp.ne.s32.totalorder %s238, %s239
      %p253 = scmp.eq.s32.totalorder %s27, 1
      %p254 = por %p252, %p253
      %p256 = scmp.ne.s32.totalorder %s239, %s255
      %p257 = scmp.eq.s32.totalorder %s27, 0
      %p258 = por %p256, %p257
      %p259 = scmp.le.s32.totalorder 1, %s21
      %p260 = scmp.lt.s32.totalorder %s21, 3
      %p261 = pnand %p259, %p260
      %p262 = pneg %p261
      // Predicated region
      $region9: #{mmd_vae_forward.1} parent=5 // pred_check
        _
      $region10: #{mmd_vae_forward.1} parent=5 // pred_check_branch
        %264 = sbr.rel (%p261) target = $region12
      $region11: #{mmd_vae_forward.1} parent=5 // pred_region
        %s265 = ssub.s32 %s21, 1
        // Predicated region
        $region13: #{mmd_vae_forward.1} parent=11 // pred_check
          %p266 = pneg %p94
        $region14: #{mmd_vae_forward.1} parent=11 // pred_check_branch
          %268 = sbr.rel (%p266) target = $region16
        $region15: #{mmd_vae_forward.1} parent=11 // pred_region
          %s270 = ssub.s32 8192, 8192
          %271 = vsyncadd [#allocation3], %s270
          %s272 = sshll.u32 [#allocation2], 4
          %s273 = int_to_ptr.vmem [resolvable:$true] %s272
          %278 = dma.hbm_to_vmem [thread:$0]  %s2, 8192, %s273, [#allocation3], 64, 64, 4
        $region16: #{mmd_vae_forward.1} parent=11 // pred_fallthru
          _
        // Predicated region
        $region17: #{mmd_vae_forward.1} parent=11 // pred_check
          %p279 = pneg %p115
        $region18: #{mmd_vae_forward.1} parent=11 // pred_check_branch
          %281 = sbr.rel (%p279) target = $region20
        $region19: #{mmd_vae_forward.1} parent=11 // pred_region
          _
        $region20: #{mmd_vae_forward.1} parent=11 // pred_fallthru
          _
        // Predicated region
        $region21: #{mmd_vae_forward.1} parent=11 // pred_check
          %p282 = pneg %p136
        $region22: #{mmd_vae_forward.1} parent=11 // pred_check_branch
          %284 = sbr.rel (%p282) target = $region24
        $region23: #{mmd_vae_forward.1} parent=11 // pred_region
          %s286 = ssub.s32 1024, 1024
          %287 = vsyncadd [#allocation6], %s286
          %s288 = sshll.u32 [#allocation5], 4
          %s289 = int_to_ptr.vmem [resolvable:$true] %s288
          %294 = dma.hbm_to_vmem [thread:$0]  %s4, 1024, %s289, [#allocation6], 64, 64, 4
        $region24: #{mmd_vae_forward.1} parent=11 // pred_fallthru
          _
        // Predicated region
        $region25: #{mmd_vae_forward.1} parent=11 // pred_check
          %p295 = pneg %p157
        $region26: #{mmd_vae_forward.1} parent=11 // pred_check_branch
          %297 = sbr.rel (%p295) target = $region28
        $region27: #{mmd_vae_forward.1} parent=11 // pred_region
          _
        $region28: #{mmd_vae_forward.1} parent=11 // pred_fallthru
          _
        // Predicated region
        $region29: #{mmd_vae_forward.1} parent=11 // pred_check
          %p298 = pneg %p178
        $region30: #{mmd_vae_forward.1} parent=11 // pred_check_branch
          %300 = sbr.rel (%p298) target = $region32
        $region31: #{mmd_vae_forward.1} parent=11 // pred_region
          %s302 = ssub.s32 8192, 8192
          %303 = vsyncadd [#allocation6], %s302
          %s304 = sshll.u32 [#allocation7], 4
          %s305 = int_to_ptr.vmem [resolvable:$true] %s304
          %310 = dma.hbm_to_vmem [thread:$0]  %s6, 8192, %s305, [#allocation6], 512, 512, 32
        $region32: #{mmd_vae_forward.1} parent=11 // pred_fallthru
          _
        // Predicated region
        $region33: #{mmd_vae_forward.1} parent=11 // pred_check
          %p311 = pneg %p199
        $region34: #{mmd_vae_forward.1} parent=11 // pred_check_branch
          %313 = sbr.rel (%p311) target = $region36
        $region35: #{mmd_vae_forward.1} parent=11 // pred_region
          _
        $region36: #{mmd_vae_forward.1} parent=11 // pred_fallthru
          _
      $region12: #{mmd_vae_forward.1} parent=5 // pred_fallthru
        _
      %p314 = scmp.lt.s32.totalorder %s21, 2
      // Predicated region
      $region37: #{mmd_vae_forward.1} parent=5 // pred_check
        %p315 = pneg %p314
      $region38: #{mmd_vae_forward.1} parent=5 // pred_check_branch
        %317 = sbr.rel (%p315) target = $region40
      $region39: #{mmd_vae_forward.1} parent=5 // pred_region
        // Predicated region
        $region41: #{mmd_vae_forward.1} parent=39 // pred_check
          %p318 = pneg %p41
        $region42: #{mmd_vae_forward.1} parent=39 // pred_check_branch
          %320 = sbr.rel (%p318) target = $region44
        $region43: #{mmd_vae_forward.1} parent=39 // pred_region
          %p321 = scmp.lt.s32.totalorder %s21, 1
          %s322 = scalar_select %p321, %s21, 1
          %s323 = smul.addr %s322, 4
          %s324 = scalar_lea.vmem %s0, %s323
        $region44: #{mmd_vae_forward.1} parent=39 // pred_fallthru
          _
        // Predicated region
        $region45: #{mmd_vae_forward.1} parent=39 // pred_check
          %p325 = pneg %p67
        $region46: #{mmd_vae_forward.1} parent=39 // pred_check_branch
          %327 = sbr.rel (%p325) target = $region48
        $region47: #{mmd_vae_forward.1} parent=39 // pred_region
          %p328 = scmp.lt.s32.totalorder %s21, 1
          %s329 = scalar_select %p328, %s21, 1
          %s330 = smul.addr %s329, 8
          %s331 = scalar_lea.vmem %s1, %s330
        $region48: #{mmd_vae_forward.1} parent=39 // pred_fallthru
          _
      $region40: #{mmd_vae_forward.1} parent=5 // pred_fallthru
        _
      %p332 = scmp.le.s32.totalorder 1, %s21
      %p333 = scmp.lt.s32.totalorder %s21, 3
      %p334 = pnand %p332, %p333
      %p335 = pneg %p334
      // Predicated region
      $region49: #{mmd_vae_forward.1} parent=5 // pred_check
        _
      $region50: #{mmd_vae_forward.1} parent=5 // pred_check_branch
        %337 = sbr.rel (%p334) target = $region52
      $region51: #{mmd_vae_forward.1} parent=5 // pred_region
        %s338 = ssub.s32 %s21, 1
        // Predicated region
        $region53: #{mmd_vae_forward.1} parent=51 // pred_check
          %p339 = pneg %p94
        $region54: #{mmd_vae_forward.1} parent=51 // pred_check_branch
          %341 = sbr.rel (%p339) target = $region56
        $region55: #{mmd_vae_forward.1} parent=51 // pred_region
          %342 = dma.done [#allocation3], 8192
        $region56: #{mmd_vae_forward.1} parent=51 // pred_fallthru
          _
        // Predicated region
        $region57: #{mmd_vae_forward.1} parent=51 // pred_check
          %p343 = pneg %p136
        $region58: #{mmd_vae_forward.1} parent=51 // pred_check_branch
          %345 = sbr.rel (%p343) target = $region60
        $region59: #{mmd_vae_forward.1} parent=51 // pred_region
          %346 = dma.done [#allocation6], 1024
        $region60: #{mmd_vae_forward.1} parent=51 // pred_fallthru
          _
        // Predicated region
        $region61: #{mmd_vae_forward.1} parent=51 // pred_check
          %p347 = pneg %p178
        $region62: #{mmd_vae_forward.1} parent=51 // pred_check_branch
          %349 = sbr.rel (%p347) target = $region64
        $region63: #{mmd_vae_forward.1} parent=51 // pred_region
          %350 = dma.done [#allocation6], 8192
        $region64: #{mmd_vae_forward.1} parent=51 // pred_fallthru
          _
        %p351 = scmp.lt.s32.totalorder %s26, 1
        %s352 = scalar_select %p351, %s26, 1
        %s353 = smul.addr %s352, 4
        %s354 = scalar_lea.vmem %s0, %s353
        %p355 = pneg %p47
        %p356 = pneg %p44
        %p357 = scmp.lt.s32.totalorder %s26, 1
        %s358 = scalar_select %p357, %s26, 1
        %s359 = smul.addr %s358, 8
        %s360 = scalar_lea.vmem %s1, %s359
        %p361 = pneg %p73
        %p362 = pneg %p70
        %p363 = pneg %p94
        %p364 = pneg %p91
        %p365 = pneg %p115
        %p366 = pneg %p112
        %p367 = pneg %p136
        %p368 = pneg %p133
        %p369 = pneg %p157
        %p370 = pneg %p154
        %p371 = pneg %p178
        %p372 = pneg %p175
        %p373 = pneg %p199
        %p374 = pneg %p196
        %p375 = pneg %p225
        %p376 = pneg %p222
        %p377 = scmp.lt.s32.totalorder %s26, 1
        %s378 = scalar_select %p377, %s26, 1
        %s379 = smul.addr %s378, 8
        %s380 = smul.addr %s379, 8
        %s381 = scalar_lea.vmem %s8, %s380
        %p382 = pneg %p251
        %p383 = pneg %p248
        %s384 = sand.u32 %s238, 1
        %s385 = scalar_lea.sflag [#allocation4], %s384
        %s386 = sand.u32 %s238, 1
        %s387 = scalar_lea.vmem [#allocation8], %s386
        %p388 = scmp.lt.s32.totalorder %s26, 1
        %s389 = scalar_select %p388, %s26, 1
        %s390 = smul.addr %s389, 4
        %s391 = scalar_lea.vmem %s0, %s390
        %p392 = scmp.lt.s32.totalorder %s26, 1
        %s393 = scalar_select %p392, %s26, 1
        %s394 = smul.addr %s393, 8
        %s395 = scalar_lea.vmem %s1, %s394
        %p396 = scmp.lt.s32.totalorder %s26, 1
        %s397 = scalar_select %p396, %s26, 1
        %s398 = smul.addr %s397, 8
        %s399 = smul.addr %s398, 8
        %s400 = scalar_lea.vmem %s8, %s399
        %v402 = vld [vmem:[%s395] sm:$0xff]
        %v403 = vld [vmem:[#allocation2] sm:$0xf]
        %v404 = vld [vmem:[#allocation2 + $0x4] sm:$0xf]
        %v405 = vld [vmem:[#allocation2 + $0x8] sm:$0xf]
        %v406 = vld [vmem:[#allocation2 + $0xc] sm:$0xf]
        %v407 = vld [vmem:[#allocation2 + $0x10] sm:$0xf]
        %v408 = vld [vmem:[#allocation2 + $0x14] sm:$0xf]
        %v409 = vld [vmem:[#allocation2 + $0x18] sm:$0xf]
        %v410 = vld [vmem:[#allocation2 + $0x1c] sm:$0xf]
        %v411 = vld [vmem:[#allocation2 + $0x20] sm:$0xf]
        %v412 = vld [vmem:[#allocation2 + $0x24] sm:$0xf]
        %v413 = vld [vmem:[#allocation2 + $0x28] sm:$0xf]
        %v414 = vld [vmem:[#allocation2 + $0x2c] sm:$0xf]
        %v415 = vld [vmem:[#allocation2 + $0x30] sm:$0xf]
        %v416 = vld [vmem:[#allocation2 + $0x34] sm:$0xf]
        %v417 = vld [vmem:[#allocation2 + $0x38] sm:$0xf]
        %v418 = vld [vmem:[#allocation2 + $0x3c] sm:$0xf]
        %v419 = vld [vmem:[#allocation2 + $0x40] sm:$0xf]
        %v420 = vld [vmem:[#allocation2 + $0x44] sm:$0xf]
        %v421 = vld [vmem:[#allocation2 + $0x48] sm:$0xf]
        %v422 = vld [vmem:[#allocation2 + $0x4c] sm:$0xf]
        %v423 = vld [vmem:[#allocation2 + $0x50] sm:$0xf]
        %v424 = vld [vmem:[#allocation2 + $0x54] sm:$0xf]
        %v425 = vld [vmem:[#allocation2 + $0x58] sm:$0xf]
        %v426 = vld [vmem:[#allocation2 + $0x5c] sm:$0xf]
        %v427 = vld [vmem:[#allocation2 + $0x60] sm:$0xf]
        %v428 = vld [vmem:[#allocation2 + $0x64] sm:$0xf]
        %v429 = vld [vmem:[#allocation2 + $0x68] sm:$0xf]
        %v430 = vld [vmem:[#allocation2 + $0x6c] sm:$0xf]
        %v431 = vld [vmem:[#allocation2 + $0x70] sm:$0xf]
        %v432 = vld [vmem:[#allocation2 + $0x74] sm:$0xf]
        %v433 = vld [vmem:[#allocation2 + $0x78] sm:$0xf]
        %v434 = vld [vmem:[#allocation2 + $0x7c] sm:$0xf]
        %v435 = vld [vmem:[#allocation2 + $0x80] sm:$0xf]
        %v436 = vld [vmem:[#allocation2 + $0x84] sm:$0xf]
        %v437 = vld [vmem:[#allocation2 + $0x88] sm:$0xf]
        %v438 = vld [vmem:[#allocation2 + $0x8c] sm:$0xf]
        %v439 = vld [vmem:[#allocation2 + $0x90] sm:$0xf]
        %v440 = vld [vmem:[#allocation2 + $0x94] sm:$0xf]
        %v441 = vld [vmem:[#allocation2 + $0x98] sm:$0xf]
        %v442 = vld [vmem:[#allocation2 + $0x9c] sm:$0xf]
        %v443 = vld [vmem:[#allocation2 + $0xa0] sm:$0xf]
        %v444 = vld [vmem:[#allocation2 + $0xa4] sm:$0xf]
        %v445 = vld [vmem:[#allocation2 + $0xa8] sm:$0xf]
        %v446 = vld [vmem:[#allocation2 + $0xac] sm:$0xf]
        %v447 = vld [vmem:[#allocation2 + $0xb0] sm:$0xf]
        %v448 = vld [vmem:[#allocation2 + $0xb4] sm:$0xf]
        %v449 = vld [vmem:[#allocation2 + $0xb8] sm:$0xf]
        %v450 = vld [vmem:[#allocation2 + $0xbc] sm:$0xf]
        %v451 = vld [vmem:[#allocation2 + $0xc0] sm:$0xf]
        %v452 = vld [vmem:[#allocation2 + $0xc4] sm:$0xf]
        %v453 = vld [vmem:[#allocation2 + $0xc8] sm:$0xf]
        %v454 = vld [vmem:[#allocation2 + $0xcc] sm:$0xf]
        %v455 = vld [vmem:[#allocation2 + $0xd0] sm:$0xf]
        %v456 = vld [vmem:[#allocation2 + $0xd4] sm:$0xf]
        %v457 = vld [vmem:[#allocation2 + $0xd8] sm:$0xf]
        %v458 = vld [vmem:[#allocation2 + $0xdc] sm:$0xf]
        %v459 = vld [vmem:[#allocation2 + $0xe0] sm:$0xf]
        %v460 = vld [vmem:[#allocation2 + $0xe4] sm:$0xf]
        %v461 = vld [vmem:[#allocation2 + $0xe8] sm:$0xf]
        %v462 = vld [vmem:[#allocation2 + $0xec] sm:$0xf]
        %v463 = vld [vmem:[#allocation2 + $0xf0] sm:$0xf]
        %v464 = vld [vmem:[#allocation2 + $0xf4] sm:$0xf]
        %v465 = vld [vmem:[#allocation2 + $0xf8] sm:$0xf]
        %v466 = vld [vmem:[#allocation2 + $0xfc] sm:$0xf]
        %v467 = vld [vmem:[#allocation2 + $0x100] sm:$0xf]
        %v468 = vld [vmem:[#allocation2 + $0x104] sm:$0xf]
        %v469 = vld [vmem:[#allocation2 + $0x108] sm:$0xf]
        %v470 = vld [vmem:[#allocation2 + $0x10c] sm:$0xf]
        %v471 = vld [vmem:[#allocation2 + $0x110] sm:$0xf]
        %v472 = vld [vmem:[#allocation2 + $0x114] sm:$0xf]
        %v473 = vld [vmem:[#allocation2 + $0x118] sm:$0xf]
        %v474 = vld [vmem:[#allocation2 + $0x11c] sm:$0xf]
        %v475 = vld [vmem:[#allocation2 + $0x120] sm:$0xf]
        %v476 = vld [vmem:[#allocation2 + $0x124] sm:$0xf]
        %v477 = vld [vmem:[#allocation2 + $0x128] sm:$0xf]
        %v478 = vld [vmem:[#allocation2 + $0x12c] sm:$0xf]
        %v479 = vld [vmem:[#allocation2 + $0x130] sm:$0xf]
        %v480 = vld [vmem:[#allocation2 + $0x134] sm:$0xf]
        %v481 = vld [vmem:[#allocation2 + $0x138] sm:$0xf]
        %v482 = vld [vmem:[#allocation2 + $0x13c] sm:$0xf]
        %v483 = vld [vmem:[#allocation2 + $0x140] sm:$0xf]
        %v484 = vld [vmem:[#allocation2 + $0x144] sm:$0xf]
        %v485 = vld [vmem:[#allocation2 + $0x148] sm:$0xf]
        %v486 = vld [vmem:[#allocation2 + $0x14c] sm:$0xf]
        %v487 = vld [vmem:[#allocation2 + $0x150] sm:$0xf]
        %v488 = vld [vmem:[#allocation2 + $0x154] sm:$0xf]
        %v489 = vld [vmem:[#allocation2 + $0x158] sm:$0xf]
        %v490 = vld [vmem:[#allocation2 + $0x15c] sm:$0xf]
        %v491 = vld [vmem:[#allocation2 + $0x160] sm:$0xf]
        %v492 = vld [vmem:[#allocation2 + $0x164] sm:$0xf]
        %v493 = vld [vmem:[#allocation2 + $0x168] sm:$0xf]
        %v494 = vld [vmem:[#allocation2 + $0x16c] sm:$0xf]
        %v495 = vld [vmem:[#allocation2 + $0x170] sm:$0xf]
        %v496 = vld [vmem:[#allocation2 + $0x174] sm:$0xf]
        %v497 = vld [vmem:[#allocation2 + $0x178] sm:$0xf]
        %v498 = vld [vmem:[#allocation2 + $0x17c] sm:$0xf]
        %v499 = vld [vmem:[#allocation2 + $0x180] sm:$0xf]
        %v500 = vld [vmem:[#allocation2 + $0x184] sm:$0xf]
        %v501 = vld [vmem:[#allocation2 + $0x188] sm:$0xf]
        %v502 = vld [vmem:[#allocation2 + $0x18c] sm:$0xf]
        %v503 = vld [vmem:[#allocation2 + $0x190] sm:$0xf]
        %v504 = vld [vmem:[#allocation2 + $0x194] sm:$0xf]
        %v505 = vld [vmem:[#allocation2 + $0x198] sm:$0xf]
        %v506 = vld [vmem:[#allocation2 + $0x19c] sm:$0xf]
        %v507 = vld [vmem:[#allocation2 + $0x1a0] sm:$0xf]
        %v508 = vld [vmem:[#allocation2 + $0x1a4] sm:$0xf]
        %v509 = vld [vmem:[#allocation2 + $0x1a8] sm:$0xf]
        %v510 = vld [vmem:[#allocation2 + $0x1ac] sm:$0xf]
        %v511 = vld [vmem:[#allocation2 + $0x1b0] sm:$0xf]
        %v512 = vld [vmem:[#allocation2 + $0x1b4] sm:$0xf]
        %v513 = vld [vmem:[#allocation2 + $0x1b8] sm:$0xf]
        %v514 = vld [vmem:[#allocation2 + $0x1bc] sm:$0xf]
        %v515 = vld [vmem:[#allocation2 + $0x1c0] sm:$0xf]
        %v516 = vld [vmem:[#allocation2 + $0x1c4] sm:$0xf]
        %v517 = vld [vmem:[#allocation2 + $0x1c8] sm:$0xf]
        %v518 = vld [vmem:[#allocation2 + $0x1cc] sm:$0xf]
        %v519 = vld [vmem:[#allocation2 + $0x1d0] sm:$0xf]
        %v520 = vld [vmem:[#allocation2 + $0x1d4] sm:$0xf]
        %v521 = vld [vmem:[#allocation2 + $0x1d8] sm:$0xf]
        %v522 = vld [vmem:[#allocation2 + $0x1dc] sm:$0xf]
        %v523 = vld [vmem:[#allocation2 + $0x1e0] sm:$0xf]
        %v524 = vld [vmem:[#allocation2 + $0x1e4] sm:$0xf]
        %v525 = vld [vmem:[#allocation2 + $0x1e8] sm:$0xf]
        %v526 = vld [vmem:[#allocation2 + $0x1ec] sm:$0xf]
        %v527 = vld [vmem:[#allocation2 + $0x1f0] sm:$0xf]
        %v528 = vld [vmem:[#allocation2 + $0x1f4] sm:$0xf]
        %v529 = vld [vmem:[#allocation2 + $0x1f8] sm:$0xf]
        %v530 = vld [vmem:[#allocation2 + $0x1fc] sm:$0xf]
        %v531 = vld [vmem:[%s3] sm:$0x1]
        %v533 = vcombine.high %v402, %v402
        %v535 = vunpack.c.l.s4 1966171168
        %v536 = vunpack.c.0.s8 %v535
        %v537 = vlaneseq
        %v538 = vshrl.u32 %v537, 7
        %v539 = vsub.s32 %v536, %v538
        %v540 = vrot.slane %v402, %v539
        %v542 = vunpack.c.l.s4 1966171168
        %v543 = vunpack.c.0.s8 %v542
        %v544 = vlaneseq
        %v545 = vshrl.u32 %v544, 7
        %v546 = vsub.s32 %v543, %v545
        %v547 = vrot.slane %v533, %v546
        %v548 = vcombine.high %v540, %v540
        %v549 = vcombine.high %v547, %v547
        %v551 = vunpack.c.l.s4 1966171168
        %v552 = vunpack.c.0.s8 %v551
        %v553 = vlaneseq
        %v554 = vshrl.u32 %v553, 7
        %v555 = vsub.s32 %v552, %v554
        %v556 = vrot.slane %v540, %v555
        %v558 = vunpack.c.l.s4 1966171168
        %v559 = vunpack.c.0.s8 %v558
        %v560 = vlaneseq
        %v561 = vshrl.u32 %v560, 7
        %v562 = vsub.s32 %v559, %v561
        %v563 = vrot.slane %v547, %v562
        %v565 = vunpack.c.l.s4 1966171168
        %v566 = vunpack.c.0.s8 %v565
        %v567 = vlaneseq
        %v568 = vshrl.u32 %v567, 7
        %v569 = vsub.s32 %v566, %v568
        %v570 = vrot.slane %v548, %v569
        %v572 = vunpack.c.l.s4 1966171168
        %v573 = vunpack.c.0.s8 %v572
        %v574 = vlaneseq
        %v575 = vshrl.u32 %v574, 7
        %v576 = vsub.s32 %v573, %v575
        %v577 = vrot.slane %v549, %v576
        %v578 = vcombine.high %v556, %v556
        %v579 = vcombine.high %v563, %v563
        %v580 = vcombine.high %v570, %v570
        %v581 = vcombine.high %v577, %v577
        %v718 = vunpack.c.l.b16 %v403
        %v719 = vunpack.c.l.b16 %v404
        %v720 = vunpack.c.l.b16 %v405
        %v721 = vunpack.c.l.b16 %v406
        %v722 = vunpack.c.l.b16 %v407
        %v723 = vunpack.c.l.b16 %v408
        %v724 = vunpack.c.l.b16 %v409
        %v725 = vunpack.c.l.b16 %v410
        %v726 = vunpack.c.l.b16 %v411
        %v727 = vunpack.c.l.b16 %v412
        %v728 = vunpack.c.l.b16 %v413
        %v729 = vunpack.c.l.b16 %v414
        %v730 = vunpack.c.l.b16 %v415
        %v731 = vunpack.c.l.b16 %v416
        %v732 = vunpack.c.l.b16 %v417
        %v733 = vunpack.c.l.b16 %v418
        %v734 = vunpack.c.l.b16 %v419
        %v735 = vunpack.c.l.b16 %v420
        %v736 = vunpack.c.l.b16 %v421
        %v737 = vunpack.c.l.b16 %v422
        %v738 = vunpack.c.l.b16 %v423
        %v739 = vunpack.c.l.b16 %v424
        %v740 = vunpack.c.l.b16 %v425
        %v741 = vunpack.c.l.b16 %v426
        %v742 = vunpack.c.l.b16 %v427
        %v743 = vunpack.c.l.b16 %v428
        %v744 = vunpack.c.l.b16 %v429
        %v745 = vunpack.c.l.b16 %v430
        %v746 = vunpack.c.l.b16 %v431
        %v747 = vunpack.c.l.b16 %v432
        %v748 = vunpack.c.l.b16 %v433
        %v749 = vunpack.c.l.b16 %v434
        %v750 = vunpack.c.l.b16 %v435
        %v751 = vunpack.c.l.b16 %v436
        %v752 = vunpack.c.l.b16 %v437
        %v753 = vunpack.c.l.b16 %v438
        %v754 = vunpack.c.l.b16 %v439
        %v755 = vunpack.c.l.b16 %v440
        %v756 = vunpack.c.l.b16 %v441
        %v757 = vunpack.c.l.b16 %v442
        %v758 = vunpack.c.l.b16 %v443
        %v759 = vunpack.c.l.b16 %v444
        %v760 = vunpack.c.l.b16 %v445
        %v761 = vunpack.c.l.b16 %v446
        %v762 = vunpack.c.l.b16 %v447
        %v763 = vunpack.c.l.b16 %v448
        %v764 = vunpack.c.l.b16 %v449
        %v765 = vunpack.c.l.b16 %v450
        %v766 = vunpack.c.l.b16 %v451
        %v767 = vunpack.c.l.b16 %v452
        %v768 = vunpack.c.l.b16 %v453
        %v769 = vunpack.c.l.b16 %v454
        %v770 = vunpack.c.l.b16 %v455
        %v771 = vunpack.c.l.b16 %v456
        %v772 = vunpack.c.l.b16 %v457
        %v773 = vunpack.c.l.b16 %v458
        %v774 = vunpack.c.l.b16 %v459
        %v775 = vunpack.c.l.b16 %v460
        %v776 = vunpack.c.l.b16 %v461
        %v777 = vunpack.c.l.b16 %v462
        %v778 = vunpack.c.l.b16 %v463
        %v779 = vunpack.c.l.b16 %v464
        %v780 = vunpack.c.l.b16 %v465
        %v781 = vunpack.c.l.b16 %v466
        %v782 = vunpack.c.l.b16 %v467
        %v783 = vunpack.c.l.b16 %v468
        %v784 = vunpack.c.l.b16 %v469
        %v785 = vunpack.c.l.b16 %v470
        %v786 = vunpack.c.l.b16 %v471
        %v787 = vunpack.c.l.b16 %v472
        %v788 = vunpack.c.l.b16 %v473
        %v789 = vunpack.c.l.b16 %v474
        %v790 = vunpack.c.l.b16 %v475
        %v791 = vunpack.c.l.b16 %v476
        %v792 = vunpack.c.l.b16 %v477
        %v793 = vunpack.c.l.b16 %v478
        %v794 = vunpack.c.l.b16 %v479
        %v795 = vunpack.c.l.b16 %v480
        %v796 = vunpack.c.l.b16 %v481
        %v797 = vunpack.c.l.b16 %v482
        %v798 = vunpack.c.l.b16 %v483
        %v799 = vunpack.c.l.b16 %v484
        %v800 = vunpack.c.l.b16 %v485
        %v801 = vunpack.c.l.b16 %v486
        %v802 = vunpack.c.l.b16 %v487
        %v803 = vunpack.c.l.b16 %v488
        %v804 = vunpack.c.l.b16 %v489
        %v805 = vunpack.c.l.b16 %v490
        %v806 = vunpack.c.l.b16 %v491
        %v807 = vunpack.c.l.b16 %v492
        %v808 = vunpack.c.l.b16 %v493
        %v809 = vunpack.c.l.b16 %v494
        %v810 = vunpack.c.l.b16 %v495
        %v811 = vunpack.c.l.b16 %v496
        %v812 = vunpack.c.l.b16 %v497
        %v813 = vunpack.c.l.b16 %v498
        %v814 = vunpack.c.l.b16 %v499
        %v815 = vunpack.c.l.b16 %v500
        %v816 = vunpack.c.l.b16 %v501
        %v817 = vunpack.c.l.b16 %v502
        %v818 = vunpack.c.l.b16 %v503
        %v819 = vunpack.c.l.b16 %v504
        %v820 = vunpack.c.l.b16 %v505
        %v821 = vunpack.c.l.b16 %v506
        %v822 = vunpack.c.l.b16 %v507
        %v823 = vunpack.c.l.b16 %v508
        %v824 = vunpack.c.l.b16 %v509
        %v825 = vunpack.c.l.b16 %v510
        %v826 = vunpack.c.l.b16 %v511
        %v827 = vunpack.c.l.b16 %v512
        %v828 = vunpack.c.l.b16 %v513
        %v829 = vunpack.c.l.b16 %v514
        %v830 = vunpack.c.l.b16 %v515
        %v831 = vunpack.c.l.b16 %v516
        %v832 = vunpack.c.l.b16 %v517
        %v833 = vunpack.c.l.b16 %v518
        %v834 = vunpack.c.l.b16 %v519
        %v835 = vunpack.c.l.b16 %v520
        %v836 = vunpack.c.l.b16 %v521
        %v837 = vunpack.c.l.b16 %v522
        %v838 = vunpack.c.l.b16 %v523
        %v839 = vunpack.c.l.b16 %v524
        %v840 = vunpack.c.l.b16 %v525
        %v841 = vunpack.c.l.b16 %v526
        %v842 = vunpack.c.l.b16 %v527
        %v843 = vunpack.c.l.b16 %v528
        %v844 = vunpack.c.l.b16 %v529
        %v845 = vunpack.c.l.b16 %v530
        %v846 = vpack.c.b16 %v719, %v718
        %v847 = vpack.c.b16 %v721, %v720
        %v848 = vpack.c.b16 %v723, %v722
        %v849 = vpack.c.b16 %v725, %v724
        %v850 = vpack.c.b16 %v727, %v726
        %v851 = vpack.c.b16 %v729, %v728
        %v852 = vpack.c.b16 %v731, %v730
        %v853 = vpack.c.b16 %v733, %v732
        %v854 = vpack.c.b16 %v735, %v734
        %v855 = vpack.c.b16 %v737, %v736
        %v856 = vpack.c.b16 %v739, %v738
        %v857 = vpack.c.b16 %v741, %v740
        %v858 = vpack.c.b16 %v743, %v742
        %v859 = vpack.c.b16 %v745, %v744
        %v860 = vpack.c.b16 %v747, %v746
        %v861 = vpack.c.b16 %v749, %v748
        %v862 = vpack.c.b16 %v751, %v750
        %v863 = vpack.c.b16 %v753, %v752
        %v864 = vpack.c.b16 %v755, %v754
        %v865 = vpack.c.b16 %v757, %v756
        %v866 = vpack.c.b16 %v759, %v758
        %v867 = vpack.c.b16 %v761, %v760
        %v868 = vpack.c.b16 %v763, %v762
        %v869 = vpack.c.b16 %v765, %v764
        %v870 = vpack.c.b16 %v767, %v766
        %v871 = vpack.c.b16 %v769, %v768
        %v872 = vpack.c.b16 %v771, %v770
        %v873 = vpack.c.b16 %v773, %v772
        %v874 = vpack.c.b16 %v775, %v774
        %v875 = vpack.c.b16 %v777, %v776
        %v876 = vpack.c.b16 %v779, %v778
        %v877 = vpack.c.b16 %v781, %v780
        %v878 = vpack.c.b16 %v783, %v782
        %v879 = vpack.c.b16 %v785, %v784
        %v880 = vpack.c.b16 %v787, %v786
        %v881 = vpack.c.b16 %v789, %v788
        %v882 = vpack.c.b16 %v791, %v790
        %v883 = vpack.c.b16 %v793, %v792
        %v884 = vpack.c.b16 %v795, %v794
        %v885 = vpack.c.b16 %v797, %v796
        %v886 = vpack.c.b16 %v799, %v798
        %v887 = vpack.c.b16 %v801, %v800
        %v888 = vpack.c.b16 %v803, %v802
        %v889 = vpack.c.b16 %v805, %v804
        %v890 = vpack.c.b16 %v807, %v806
        %v891 = vpack.c.b16 %v809, %v808
        %v892 = vpack.c.b16 %v811, %v810
        %v893 = vpack.c.b16 %v813, %v812
        %v894 = vpack.c.b16 %v815, %v814
        %v895 = vpack.c.b16 %v817, %v816
        %v896 = vpack.c.b16 %v819, %v818
        %v897 = vpack.c.b16 %v821, %v820
        %v898 = vpack.c.b16 %v823, %v822
        %v899 = vpack.c.b16 %v825, %v824
        %v900 = vpack.c.b16 %v827, %v826
        %v901 = vpack.c.b16 %v829, %v828
        %v902 = vpack.c.b16 %v831, %v830
        %v903 = vpack.c.b16 %v833, %v832
        %v904 = vpack.c.b16 %v835, %v834
        %v905 = vpack.c.b16 %v837, %v836
        %v906 = vpack.c.b16 %v839, %v838
        %v907 = vpack.c.b16 %v841, %v840
        %v908 = vpack.c.b16 %v843, %v842
        %v909 = vpack.c.b16 %v845, %v844
        %974 = vmatprep.subr.bf16.mxu0 0
        %975 = vmatpush1.bf16.msra.mxu0 %v846
        %976 = vmatprep.subr.bf16.mxu0 0
        %977 = vmatpush1.bf16.msra.mxu0 %v847
        %978 = vmatprep.subr.bf16.mxu0 0
        %979 = vmatpush1.bf16.msra.mxu0 %v848
        %980 = vmatprep.subr.bf16.mxu0 0
        %981 = vmatpush1.bf16.msra.mxu0 %v849
        %982 = vmatprep.subr.bf16.mxu0 0
        %983 = vmatpush1.bf16.msra.mxu0 %v850
        %984 = vmatprep.subr.bf16.mxu0 0
        %985 = vmatpush1.bf16.msra.mxu0 %v851
        %986 = vmatprep.subr.bf16.mxu0 0
        %987 = vmatpush1.bf16.msra.mxu0 %v852
        %988 = vmatprep.subr.bf16.mxu0 0
        %989 = vmatpush1.bf16.msra.mxu0 %v853
        %990 = vmatprep.subr.bf16.mxu0 0
        %991 = vmatpush1.bf16.msra.mxu0 %v854
        %992 = vmatprep.subr.bf16.mxu0 0
        %993 = vmatpush1.bf16.msra.mxu0 %v855
        %994 = vmatprep.subr.bf16.mxu0 0
        %995 = vmatpush1.bf16.msra.mxu0 %v856
        %996 = vmatprep.subr.bf16.mxu0 0
        %997 = vmatpush1.bf16.msra.mxu0 %v857
        %998 = vmatprep.subr.bf16.mxu0 0
        %999 = vmatpush1.bf16.msra.mxu0 %v858
        %1000 = vmatprep.subr.bf16.mxu0 0
        %1001 = vmatpush1.bf16.msra.mxu0 %v859
        %1002 = vmatprep.subr.bf16.mxu0 0
        %1003 = vmatpush1.bf16.msra.mxu0 %v860
        %1004 = vmatprep.subr.bf16.mxu0 0
        %1005 = vmatpush1.bf16.msra.mxu0 %v861
        %1006 = vmatprep.mubr.bf16.mxu0 %v570
        %1007 = vmatmul.mubr.bf16.gmra.mrb[0].mxu0 %v556
        %v1008 = vpop.f32.mrb[0].mxu0
        %v1009 = vadd.f32 %v531, %v1008
        %v1010 = vpop.f32.mrb[0].mxu0
        %v1011 = vpop.f32.mrb[0].mxu0
        %v1012 = vpop.f32.mrb[0].mxu0
        %1013 = vdwg.mxu0
        %1014 = vmatprep.subr.bf16.mxu0 0
        %1015 = vmatpush1.bf16.msra.mxu0 %v862
        %1016 = vmatprep.subr.bf16.mxu0 0
        %1017 = vmatpush1.bf16.msra.mxu0 %v863
        %1018 = vmatprep.subr.bf16.mxu0 0
        %1019 = vmatpush1.bf16.msra.mxu0 %v864
        %1020 = vmatprep.subr.bf16.mxu0 0
        %1021 = vmatpush1.bf16.msra.mxu0 %v865
        %1022 = vmatprep.subr.bf16.mxu0 0
        %1023 = vmatpush1.bf16.msra.mxu0 %v866
        %1024 = vmatprep.subr.bf16.mxu0 0
        %1025 = vmatpush1.bf16.msra.mxu0 %v867
        %1026 = vmatprep.subr.bf16.mxu0 0
        %1027 = vmatpush1.bf16.msra.mxu0 %v868
        %1028 = vmatprep.subr.bf16.mxu0 0
        %1029 = vmatpush1.bf16.msra.mxu0 %v869
        %1030 = vmatprep.subr.bf16.mxu0 0
        %1031 = vmatpush1.bf16.msra.mxu0 %v870
        %1032 = vmatprep.subr.bf16.mxu0 0
        %1033 = vmatpush1.bf16.msra.mxu0 %v871
        %1034 = vmatprep.subr.bf16.mxu0 0
        %1035 = vmatpush1.bf16.msra.mxu0 %v872
        %1036 = vmatprep.subr.bf16.mxu0 0
        %1037 = vmatpush1.bf16.msra.mxu0 %v873
        %1038 = vmatprep.subr.bf16.mxu0 0
        %1039 = vmatpush1.bf16.msra.mxu0 %v874
        %1040 = vmatprep.subr.bf16.mxu0 0
        %1041 = vmatpush1.bf16.msra.mxu0 %v875
        %1042 = vmatprep.subr.bf16.mxu0 0
        %1043 = vmatpush1.bf16.msra.mxu0 %v876
        %1044 = vmatprep.subr.bf16.mxu0 0
        %1045 = vmatpush1.bf16.msra.mxu0 %v877
        %1046 = vmatprep.mubr.bf16.mxu0 %v580
        %1047 = vmatmul.mubr.bf16.gmra.mrb[0].mxu0 %v578
        %v1048 = vpop.f32.mrb[0].mxu0
        %v1049 = vadd.f32 %v1009, %v1048
        %v1050 = vpop.f32.mrb[0].mxu0
        %v1051 = vpop.f32.mrb[0].mxu0
        %v1052 = vpop.f32.mrb[0].mxu0
        %1053 = vdwg.mxu0
        %1054 = vmatprep.subr.bf16.mxu0 0
        %1055 = vmatpush1.bf16.msra.mxu0 %v878
        %1056 = vmatprep.subr.bf16.mxu0 0
        %1057 = vmatpush1.bf16.msra.mxu0 %v879
        %1058 = vmatprep.subr.bf16.mxu0 0
        %1059 = vmatpush1.bf16.msra.mxu0 %v880
        %1060 = vmatprep.subr.bf16.mxu0 0
        %1061 = vmatpush1.bf16.msra.mxu0 %v881
        %1062 = vmatprep.subr.bf16.mxu0 0
        %1063 = vmatpush1.bf16.msra.mxu0 %v882
        %1064 = vmatprep.subr.bf16.mxu0 0
        %1065 = vmatpush1.bf16.msra.mxu0 %v883
        %1066 = vmatprep.subr.bf16.mxu0 0
        %1067 = vmatpush1.bf16.msra.mxu0 %v884
        %1068 = vmatprep.subr.bf16.mxu0 0
        %1069 = vmatpush1.bf16.msra.mxu0 %v885
        %1070 = vmatprep.subr.bf16.mxu0 0
        %1071 = vmatpush1.bf16.msra.mxu0 %v886
        %1072 = vmatprep.subr.bf16.mxu0 0
        %1073 = vmatpush1.bf16.msra.mxu0 %v887
        %1074 = vmatprep.subr.bf16.mxu0 0
        %1075 = vmatpush1.bf16.msra.mxu0 %v888
        %1076 = vmatprep.subr.bf16.mxu0 0
        %1077 = vmatpush1.bf16.msra.mxu0 %v889
        %1078 = vmatprep.subr.bf16.mxu0 0
        %1079 = vmatpush1.bf16.msra.mxu0 %v890
        %1080 = vmatprep.subr.bf16.mxu0 0
        %1081 = vmatpush1.bf16.msra.mxu0 %v891
        %1082 = vmatprep.subr.bf16.mxu0 0
        %1083 = vmatpush1.bf16.msra.mxu0 %v892
        %1084 = vmatprep.subr.bf16.mxu0 0
        %1085 = vmatpush1.bf16.msra.mxu0 %v893
        %1086 = vmatprep.mubr.bf16.mxu0 %v577
        %1087 = vmatmul.mubr.bf16.gmra.mrb[0].mxu0 %v563
        %v1088 = vpop.f32.mrb[0].mxu0
        %v1089 = vadd.f32 %v1049, %v1088
        %v1090 = vpop.f32.mrb[0].mxu0
        %v1091 = vpop.f32.mrb[0].mxu0
        %v1092 = vpop.f32.mrb[0].mxu0
        %1093 = vdwg.mxu0
        %1094 = vmatprep.subr.bf16.mxu0 0
        %1095 = vmatpush1.bf16.msra.mxu0 %v894
        %1096 = vmatprep.subr.bf16.mxu0 0
        %1097 = vmatpush1.bf16.msra.mxu0 %v895
        %1098 = vmatprep.subr.bf16.mxu0 0
        %1099 = vmatpush1.bf16.msra.mxu0 %v896
        %1100 = vmatprep.subr.bf16.mxu0 0
        %1101 = vmatpush1.bf16.msra.mxu0 %v897
        %1102 = vmatprep.subr.bf16.mxu0 0
        %1103 = vmatpush1.bf16.msra.mxu0 %v898
        %1104 = vmatprep.subr.bf16.mxu0 0
        %1105 = vmatpush1.bf16.msra.mxu0 %v899
        %1106 = vmatprep.subr.bf16.mxu0 0
        %1107 = vmatpush1.bf16.msra.mxu0 %v900
        %1108 = vmatprep.subr.bf16.mxu0 0
        %1109 = vmatpush1.bf16.msra.mxu0 %v901
        %1110 = vmatprep.subr.bf16.mxu0 0
        %1111 = vmatpush1.bf16.msra.mxu0 %v902
        %1112 = vmatprep.subr.bf16.mxu0 0
        %1113 = vmatpush1.bf16.msra.mxu0 %v903
        %1114 = vmatprep.subr.bf16.mxu0 0
        %1115 = vmatpush1.bf16.msra.mxu0 %v904
        %1116 = vmatprep.subr.bf16.mxu0 0
        %1117 = vmatpush1.bf16.msra.mxu0 %v905
        %1118 = vmatprep.subr.bf16.mxu0 0
        %1119 = vmatpush1.bf16.msra.mxu0 %v906
        %1120 = vmatprep.subr.bf16.mxu0 0
        %1121 = vmatpush1.bf16.msra.mxu0 %v907
        %1122 = vmatprep.subr.bf16.mxu0 0
        %1123 = vmatpush1.bf16.msra.mxu0 %v908
        %1124 = vmatprep.subr.bf16.mxu0 0
        %1125 = vmatpush1.bf16.msra.mxu0 %v909
        %1126 = vmatprep.mubr.bf16.mxu0 %v581
        %1127 = vmatmul.mubr.bf16.gmra.mrb[0].mxu0 %v579
        %v1128 = vpop.f32.mrb[0].mxu0
        %v1129 = vadd.f32 %v1089, %v1128
        %v1130 = vpop.f32.mrb[0].mxu0
        %v1131 = vpop.f32.mrb[0].mxu0
        %v1132 = vpop.f32.mrb[0].mxu0
        %1133 = vdwg.mxu0
        %v1134 = vtanh.pop %v1129
        %1135 = vst [vmem:[%s387] sm:$0x1] %v1134
        %v1136 = vld [vmem:[%s391] sm:$0xf]
        %v1137 = vld [vmem:[#allocation5] sm:$0xf]
        %v1138 = vld [vmem:[#allocation5 + $0x4] sm:$0xf]
        %v1139 = vld [vmem:[#allocation5 + $0x8] sm:$0xf]
        %v1140 = vld [vmem:[#allocation5 + $0xc] sm:$0xf]
        %v1141 = vld [vmem:[#allocation5 + $0x10] sm:$0xf]
        %v1142 = vld [vmem:[#allocation5 + $0x14] sm:$0xf]
        %v1143 = vld [vmem:[#allocation5 + $0x18] sm:$0xf]
        %v1144 = vld [vmem:[#allocation5 + $0x1c] sm:$0xf]
        %v1145 = vld [vmem:[#allocation5 + $0x20] sm:$0xf]
        %v1146 = vld [vmem:[#allocation5 + $0x24] sm:$0xf]
        %v1147 = vld [vmem:[#allocation5 + $0x28] sm:$0xf]
        %v1148 = vld [vmem:[#allocation5 + $0x2c] sm:$0xf]
        %v1149 = vld [vmem:[#allocation5 + $0x30] sm:$0xf]
        %v1150 = vld [vmem:[#allocation5 + $0x34] sm:$0xf]
        %v1151 = vld [vmem:[#allocation5 + $0x38] sm:$0xf]
        %v1152 = vld [vmem:[#allocation5 + $0x3c] sm:$0xf]
        %v1153 = vld [vmem:[%s5] sm:$0x1]
        %v1155 = vlaneseq
        %v1156 = vshrl.u32 %v1155, 7
        %v1157 = vsub.s32 0, %v1156
        %v1158 = vrot.slane %v1153, %v1157
        %v1176 = vunpack.c.l.b16 %v1137
        %v1177 = vunpack.c.l.b16 %v1138
        %v1178 = vunpack.c.l.b16 %v1139
        %v1179 = vunpack.c.l.b16 %v1140
        %v1180 = vunpack.c.l.b16 %v1141
        %v1181 = vunpack.c.l.b16 %v1142
        %v1182 = vunpack.c.l.b16 %v1143
        %v1183 = vunpack.c.l.b16 %v1144
        %v1184 = vunpack.c.l.b16 %v1145
        %v1185 = vunpack.c.l.b16 %v1146
        %v1186 = vunpack.c.l.b16 %v1147
        %v1187 = vunpack.c.l.b16 %v1148
        %v1188 = vunpack.c.l.b16 %v1149
        %v1189 = vunpack.c.l.b16 %v1150
        %v1190 = vunpack.c.l.b16 %v1151
        %v1191 = vunpack.c.l.b16 %v1152
        %v1192 = vpack.c.b16 %v1177, %v1176
        %v1193 = vpack.c.b16 %v1179, %v1178
        %v1194 = vpack.c.b16 %v1181, %v1180
        %v1195 = vpack.c.b16 %v1183, %v1182
        %v1196 = vpack.c.b16 %v1185, %v1184
        %v1197 = vpack.c.b16 %v1187, %v1186
        %v1198 = vpack.c.b16 %v1189, %v1188
        %v1199 = vpack.c.b16 %v1191, %v1190
        %1208 = vmatprep.subr.bf16.mxu0 0
        %1209 = vmatpush1.bf16.msra.mxu0 %v1192
        %1210 = vmatprep.subr.bf16.mxu0 0
        %1211 = vmatpush1.bf16.msra.mxu0 %v1193
        %1212 = vmatprep.subr.bf16.mxu0 0
        %1213 = vmatpush1.bf16.msra.mxu0 %v1194
        %1214 = vmatprep.subr.bf16.mxu0 0
        %1215 = vmatpush1.bf16.msra.mxu0 %v1195
        %1216 = vmatprep.subr.bf16.mxu0 0
        %1217 = vmatpush1.bf16.msra.mxu0 %v1196
        %1218 = vmatprep.subr.bf16.mxu0 0
        %1219 = vmatpush1.bf16.msra.mxu0 %v1197
        %1220 = vmatprep.subr.bf16.mxu0 0
        %1221 = vmatpush1.bf16.msra.mxu0 %v1198
        %1222 = vmatprep.subr.bf16.mxu0 0
        %1223 = vmatpush1.bf16.msra.mxu0 %v1199
        %1224 = vmatprep.subr.bf16.mxu0 0
        %1225 = vmatpush1.bf16.msra.mxu0 0
        %1226 = vmatprep.subr.bf16.mxu0 0
        %1227 = vmatpush1.bf16.msra.mxu0 0
        %1228 = vmatprep.subr.bf16.mxu0 0
        %1229 = vmatpush1.bf16.msra.mxu0 0
        %1230 = vmatprep.subr.bf16.mxu0 0
        %1231 = vmatpush1.bf16.msra.mxu0 0
        %1232 = vmatprep.subr.bf16.mxu0 0
        %1233 = vmatpush1.bf16.msra.mxu0 0
        %1234 = vmatprep.subr.bf16.mxu0 0
        %1235 = vmatpush1.bf16.msra.mxu0 0
        %1236 = vmatprep.subr.bf16.mxu0 0
        %1237 = vmatpush1.bf16.msra.mxu0 0
        %1238 = vmatprep.subr.bf16.mxu0 0
        %1239 = vmatpush1.bf16.msra.mxu0 0
        %1240 = vmatprep.mubr.bf16.mxu0 0
        %1241 = vmatmul.mubr.bf16.gmra.mrb[0].mxu0 %v1136
        %v1242 = vpop.f32.mrb[0].mxu0
        %v1243 = vadd.f32 %v1158, %v1242
        %v1244 = vpop.f32.mrb[0].mxu0
        %v1245 = vpop.f32.mrb[0].mxu0
        %v1246 = vpop.f32.mrb[0].mxu0
        %1247 = vdwg.mxu0
        %v1248 = vpack.c.bf16 %v1243, %v1243
        %v1249 = vld [vmem:[#allocation7] sm:$0xff]
        %v1250 = vld [vmem:[#allocation7 + $0x8] sm:$0xff]
        %v1251 = vld [vmem:[#allocation7 + $0x10] sm:$0xff]
        %v1252 = vld [vmem:[#allocation7 + $0x18] sm:$0xff]
        %v1253 = vld [vmem:[#allocation7 + $0x20] sm:$0xff]
        %v1254 = vld [vmem:[#allocation7 + $0x28] sm:$0xff]
        %v1255 = vld [vmem:[#allocation7 + $0x30] sm:$0xff]
        %v1256 = vld [vmem:[#allocation7 + $0x38] sm:$0xff]
        %v1257 = vld [vmem:[#allocation7 + $0x40] sm:$0xff]
        %v1258 = vld [vmem:[#allocation7 + $0x48] sm:$0xff]
        %v1259 = vld [vmem:[#allocation7 + $0x50] sm:$0xff]
        %v1260 = vld [vmem:[#allocation7 + $0x58] sm:$0xff]
        %v1261 = vld [vmem:[#allocation7 + $0x60] sm:$0xff]
        %v1262 = vld [vmem:[#allocation7 + $0x68] sm:$0xff]
        %v1263 = vld [vmem:[#allocation7 + $0x70] sm:$0xff]
        %v1264 = vld [vmem:[#allocation7 + $0x78] sm:$0xff]
        %v1265 = vld [vmem:[#allocation7 + $0x80] sm:$0xff]
        %v1266 = vld [vmem:[#allocation7 + $0x88] sm:$0xff]
        %v1267 = vld [vmem:[#allocation7 + $0x90] sm:$0xff]
        %v1268 = vld [vmem:[#allocation7 + $0x98] sm:$0xff]
        %v1269 = vld [vmem:[#allocation7 + $0xa0] sm:$0xff]
        %v1270 = vld [vmem:[#allocation7 + $0xa8] sm:$0xff]
        %v1271 = vld [vmem:[#allocation7 + $0xb0] sm:$0xff]
        %v1272 = vld [vmem:[#allocation7 + $0xb8] sm:$0xff]
        %v1273 = vld [vmem:[#allocation7 + $0xc0] sm:$0xff]
        %v1274 = vld [vmem:[#allocation7 + $0xc8] sm:$0xff]
        %v1275 = vld [vmem:[#allocation7 + $0xd0] sm:$0xff]
        %v1276 = vld [vmem:[#allocation7 + $0xd8] sm:$0xff]
        %v1277 = vld [vmem:[#allocation7 + $0xe0] sm:$0xff]
        %v1278 = vld [vmem:[#allocation7 + $0xe8] sm:$0xff]
        %v1279 = vld [vmem:[#allocation7 + $0xf0] sm:$0xff]
        %v1280 = vld [vmem:[#allocation7 + $0xf8] sm:$0xff]
        %v1281 = vld [vmem:[#allocation7 + $0x100] sm:$0xff]
        %v1282 = vld [vmem:[#allocation7 + $0x108] sm:$0xff]
        %v1283 = vld [vmem:[#allocation7 + $0x110] sm:$0xff]
        %v1284 = vld [vmem:[#allocation7 + $0x118] sm:$0xff]
        %v1285 = vld [vmem:[#allocation7 + $0x120] sm:$0xff]
        %v1286 = vld [vmem:[#allocation7 + $0x128] sm:$0xff]
        %v1287 = vld [vmem:[#allocation7 + $0x130] sm:$0xff]
        %v1288 = vld [vmem:[#allocation7 + $0x138] sm:$0xff]
        %v1289 = vld [vmem:[#allocation7 + $0x140] sm:$0xff]
        %v1290 = vld [vmem:[#allocation7 + $0x148] sm:$0xff]
        %v1291 = vld [vmem:[#allocation7 + $0x150] sm:$0xff]
        %v1292 = vld [vmem:[#allocation7 + $0x158] sm:$0xff]
        %v1293 = vld [vmem:[#allocation7 + $0x160] sm:$0xff]
        %v1294 = vld [vmem:[#allocation7 + $0x168] sm:$0xff]
        %v1295 = vld [vmem:[#allocation7 + $0x170] sm:$0xff]
        %v1296 = vld [vmem:[#allocation7 + $0x178] sm:$0xff]
        %v1297 = vld [vmem:[#allocation7 + $0x180] sm:$0xff]
        %v1298 = vld [vmem:[#allocation7 + $0x188] sm:$0xff]
        %v1299 = vld [vmem:[#allocation7 + $0x190] sm:$0xff]
        %v1300 = vld [vmem:[#allocation7 + $0x198] sm:$0xff]
        %v1301 = vld [vmem:[#allocation7 + $0x1a0] sm:$0xff]
        %v1302 = vld [vmem:[#allocation7 + $0x1a8] sm:$0xff]
        %v1303 = vld [vmem:[#allocation7 + $0x1b0] sm:$0xff]
        %v1304 = vld [vmem:[#allocation7 + $0x1b8] sm:$0xff]
        %v1305 = vld [vmem:[#allocation7 + $0x1c0] sm:$0xff]
        %v1306 = vld [vmem:[#allocation7 + $0x1c8] sm:$0xff]
        %v1307 = vld [vmem:[#allocation7 + $0x1d0] sm:$0xff]
        %v1308 = vld [vmem:[#allocation7 + $0x1d8] sm:$0xff]
        %v1309 = vld [vmem:[#allocation7 + $0x1e0] sm:$0xff]
        %v1310 = vld [vmem:[#allocation7 + $0x1e8] sm:$0xff]
        %v1311 = vld [vmem:[#allocation7 + $0x1f0] sm:$0xff]
        %v1312 = vld [vmem:[#allocation7 + $0x1f8] sm:$0xff]
        %v1313 = vld [vmem:[%s7] sm:$0xff]
        %v1315 = vlaneseq
        %v1316 = vshrl.u32 %v1315, 7
        %v1317 = vsub.s32 0, %v1316
        %v1318 = vrot.slane %v1313, %v1317
        %v1319 = vlaneseq
        %v1320 = vshrl.u32 %v1319, 7
        %v1321 = vsub.s32 1, %v1320
        %v1322 = vrot.slane %v1313, %v1321
        %v1323 = vlaneseq
        %v1324 = vshrl.u32 %v1323, 7
        %v1325 = vsub.s32 2, %v1324
        %v1326 = vrot.slane %v1313, %v1325
        %v1327 = vlaneseq
        %v1328 = vshrl.u32 %v1327, 7
        %v1329 = vsub.s32 3, %v1328
        %v1330 = vrot.slane %v1313, %v1329
        %v1331 = vlaneseq
        %v1332 = vshrl.u32 %v1331, 7
        %v1333 = vsub.s32 4, %v1332
        %v1334 = vrot.slane %v1313, %v1333
        %v1335 = vlaneseq
        %v1336 = vshrl.u32 %v1335, 7
        %v1337 = vsub.s32 5, %v1336
        %v1338 = vrot.slane %v1313, %v1337
        %v1339 = vlaneseq
        %v1340 = vshrl.u32 %v1339, 7
        %v1341 = vsub.s32 6, %v1340
        %v1342 = vrot.slane %v1313, %v1341
        %v1343 = vlaneseq
        %v1344 = vshrl.u32 %v1343, 7
        %v1345 = vsub.s32 7, %v1344
        %v1346 = vrot.slane %v1313, %v1345
        %v1419 = vunpack.c.l.b16 %v1249
        %v1420 = vunpack.c.h.b16 %v1249
        %v1421 = vunpack.c.l.b16 %v1250
        %v1422 = vunpack.c.h.b16 %v1250
        %v1423 = vunpack.c.l.b16 %v1251
        %v1424 = vunpack.c.h.b16 %v1251
        %v1425 = vunpack.c.l.b16 %v1252
        %v1426 = vunpack.c.h.b16 %v1252
        %v1427 = vunpack.c.l.b16 %v1253
        %v1428 = vunpack.c.h.b16 %v1253
        %v1429 = vunpack.c.l.b16 %v1254
        %v1430 = vunpack.c.h.b16 %v1254
        %v1431 = vunpack.c.l.b16 %v1255
        %v1432 = vunpack.c.h.b16 %v1255
        %v1433 = vunpack.c.l.b16 %v1256
        %v1434 = vunpack.c.h.b16 %v1256
        %v1435 = vunpack.c.l.b16 %v1257
        %v1436 = vunpack.c.h.b16 %v1257
        %v1437 = vunpack.c.l.b16 %v1258
        %v1438 = vunpack.c.h.b16 %v1258
        %v1439 = vunpack.c.l.b16 %v1259
        %v1440 = vunpack.c.h.b16 %v1259
        %v1441 = vunpack.c.l.b16 %v1260
        %v1442 = vunpack.c.h.b16 %v1260
        %v1443 = vunpack.c.l.b16 %v1261
        %v1444 = vunpack.c.h.b16 %v1261
        %v1445 = vunpack.c.l.b16 %v1262
        %v1446 = vunpack.c.h.b16 %v1262
        %v1447 = vunpack.c.l.b16 %v1263
        %v1448 = vunpack.c.h.b16 %v1263
        %v1449 = vunpack.c.l.b16 %v1264
        %v1450 = vunpack.c.h.b16 %v1264
        %v1451 = vunpack.c.l.b16 %v1265
        %v1452 = vunpack.c.h.b16 %v1265
        %v1453 = vunpack.c.l.b16 %v1266
        %v1454 = vunpack.c.h.b16 %v1266
        %v1455 = vunpack.c.l.b16 %v1267
        %v1456 = vunpack.c.h.b16 %v1267
        %v1457 = vunpack.c.l.b16 %v1268
        %v1458 = vunpack.c.h.b16 %v1268
        %v1459 = vunpack.c.l.b16 %v1269
        %v1460 = vunpack.c.h.b16 %v1269
        %v1461 = vunpack.c.l.b16 %v1270
        %v1462 = vunpack.c.h.b16 %v1270
        %v1463 = vunpack.c.l.b16 %v1271
        %v1464 = vunpack.c.h.b16 %v1271
        %v1465 = vunpack.c.l.b16 %v1272
        %v1466 = vunpack.c.h.b16 %v1272
        %v1467 = vunpack.c.l.b16 %v1273
        %v1468 = vunpack.c.h.b16 %v1273
        %v1469 = vunpack.c.l.b16 %v1274
        %v1470 = vunpack.c.h.b16 %v1274
        %v1471 = vunpack.c.l.b16 %v1275
        %v1472 = vunpack.c.h.b16 %v1275
        %v1473 = vunpack.c.l.b16 %v1276
        %v1474 = vunpack.c.h.b16 %v1276
        %v1475 = vunpack.c.l.b16 %v1277
        %v1476 = vunpack.c.h.b16 %v1277
        %v1477 = vunpack.c.l.b16 %v1278
        %v1478 = vunpack.c.h.b16 %v1278
        %v1479 = vunpack.c.l.b16 %v1279
        %v1480 = vunpack.c.h.b16 %v1279
        %v1481 = vunpack.c.l.b16 %v1280
        %v1482 = vunpack.c.h.b16 %v1280
        %v1483 = vunpack.c.l.b16 %v1281
        %v1484 = vunpack.c.h.b16 %v1281
        %v1485 = vunpack.c.l.b16 %v1282
        %v1486 = vunpack.c.h.b16 %v1282
        %v1487 = vunpack.c.l.b16 %v1283
        %v1488 = vunpack.c.h.b16 %v1283
        %v1489 = vunpack.c.l.b16 %v1284
        %v1490 = vunpack.c.h.b16 %v1284
        %v1491 = vunpack.c.l.b16 %v1285
        %v1492 = vunpack.c.h.b16 %v1285
        %v1493 = vunpack.c.l.b16 %v1286
        %v1494 = vunpack.c.h.b16 %v1286
        %v1495 = vunpack.c.l.b16 %v1287
        %v1496 = vunpack.c.h.b16 %v1287
        %v1497 = vunpack.c.l.b16 %v1288
        %v1498 = vunpack.c.h.b16 %v1288
        %v1499 = vunpack.c.l.b16 %v1289
        %v1500 = vunpack.c.h.b16 %v1289
        %v1501 = vunpack.c.l.b16 %v1290
        %v1502 = vunpack.c.h.b16 %v1290
        %v1503 = vunpack.c.l.b16 %v1291
        %v1504 = vunpack.c.h.b16 %v1291
        %v1505 = vunpack.c.l.b16 %v1292
        %v1506 = vunpack.c.h.b16 %v1292
        %v1507 = vunpack.c.l.b16 %v1293
        %v1508 = vunpack.c.h.b16 %v1293
        %v1509 = vunpack.c.l.b16 %v1294
        %v1510 = vunpack.c.h.b16 %v1294
        %v1511 = vunpack.c.l.b16 %v1295
        %v1512 = vunpack.c.h.b16 %v1295
        %v1513 = vunpack.c.l.b16 %v1296
        %v1514 = vunpack.c.h.b16 %v1296
        %v1515 = vunpack.c.l.b16 %v1297
        %v1516 = vunpack.c.h.b16 %v1297
        %v1517 = vunpack.c.l.b16 %v1298
        %v1518 = vunpack.c.h.b16 %v1298
        %v1519 = vunpack.c.l.b16 %v1299
        %v1520 = vunpack.c.h.b16 %v1299
        %v1521 = vunpack.c.l.b16 %v1300
        %v1522 = vunpack.c.h.b16 %v1300
        %v1523 = vunpack.c.l.b16 %v1301
        %v1524 = vunpack.c.h.b16 %v1301
        %v1525 = vunpack.c.l.b16 %v1302
        %v1526 = vunpack.c.h.b16 %v1302
        %v1527 = vunpack.c.l.b16 %v1303
        %v1528 = vunpack.c.h.b16 %v1303
        %v1529 = vunpack.c.l.b16 %v1304
        %v1530 = vunpack.c.h.b16 %v1304
        %v1531 = vunpack.c.l.b16 %v1305
        %v1532 = vunpack.c.h.b16 %v1305
        %v1533 = vunpack.c.l.b16 %v1306
        %v1534 = vunpack.c.h.b16 %v1306
        %v1535 = vunpack.c.l.b16 %v1307
        %v1536 = vunpack.c.h.b16 %v1307
        %v1537 = vunpack.c.l.b16 %v1308
        %v1538 = vunpack.c.h.b16 %v1308
        %v1539 = vunpack.c.l.b16 %v1309
        %v1540 = vunpack.c.h.b16 %v1309
        %v1541 = vunpack.c.l.b16 %v1310
        %v1542 = vunpack.c.h.b16 %v1310
        %v1543 = vunpack.c.l.b16 %v1311
        %v1544 = vunpack.c.h.b16 %v1311
        %v1545 = vunpack.c.l.b16 %v1312
        %v1546 = vunpack.c.h.b16 %v1312
        %v1547 = vpack.c.b16 %v1427, %v1419
        %v1548 = vpack.c.b16 %v1428, %v1420
        %v1549 = vpack.c.b16 %v1429, %v1421
        %v1550 = vpack.c.b16 %v1430, %v1422
        %v1551 = vpack.c.b16 %v1431, %v1423
        %v1552 = vpack.c.b16 %v1432, %v1424
        %v1553 = vpack.c.b16 %v1433, %v1425
        %v1554 = vpack.c.b16 %v1434, %v1426
        %v1555 = vpack.c.b16 %v1443, %v1435
        %v1556 = vpack.c.b16 %v1444, %v1436
        %v1557 = vpack.c.b16 %v1445, %v1437
        %v1558 = vpack.c.b16 %v1446, %v1438
        %v1559 = vpack.c.b16 %v1447, %v1439
        %v1560 = vpack.c.b16 %v1448, %v1440
        %v1561 = vpack.c.b16 %v1449, %v1441
        %v1562 = vpack.c.b16 %v1450, %v1442
        %v1563 = vpack.c.b16 %v1459, %v1451
        %v1564 = vpack.c.b16 %v1460, %v1452
        %v1565 = vpack.c.b16 %v1461, %v1453
        %v1566 = vpack.c.b16 %v1462, %v1454
        %v1567 = vpack.c.b16 %v1463, %v1455
        %v1568 = vpack.c.b16 %v1464, %v1456
        %v1569 = vpack.c.b16 %v1465, %v1457
        %v1570 = vpack.c.b16 %v1466, %v1458
        %v1571 = vpack.c.b16 %v1475, %v1467
        %v1572 = vpack.c.b16 %v1476, %v1468
        %v1573 = vpack.c.b16 %v1477, %v1469
        %v1574 = vpack.c.b16 %v1478, %v1470
        %v1575 = vpack.c.b16 %v1479, %v1471
        %v1576 = vpack.c.b16 %v1480, %v1472
        %v1577 = vpack.c.b16 %v1481, %v1473
        %v1578 = vpack.c.b16 %v1482, %v1474
        %v1579 = vpack.c.b16 %v1491, %v1483
        %v1580 = vpack.c.b16 %v1492, %v1484
        %v1581 = vpack.c.b16 %v1493, %v1485
        %v1582 = vpack.c.b16 %v1494, %v1486
        %v1583 = vpack.c.b16 %v1495, %v1487
        %v1584 = vpack.c.b16 %v1496, %v1488
        %v1585 = vpack.c.b16 %v1497, %v1489
        %v1586 = vpack.c.b16 %v1498, %v1490
        %v1587 = vpack.c.b16 %v1507, %v1499
        %v1588 = vpack.c.b16 %v1508, %v1500
        %v1589 = vpack.c.b16 %v1509, %v1501
        %v1590 = vpack.c.b16 %v1510, %v1502
        %v1591 = vpack.c.b16 %v1511, %v1503
        %v1592 = vpack.c.b16 %v1512, %v1504
        %v1593 = vpack.c.b16 %v1513, %v1505
        %v1594 = vpack.c.b16 %v1514, %v1506
        %v1595 = vpack.c.b16 %v1523, %v1515
        %v1596 = vpack.c.b16 %v1524, %v1516
        %v1597 = vpack.c.b16 %v1525, %v1517
        %v1598 = vpack.c.b16 %v1526, %v1518
        %v1599 = vpack.c.b16 %v1527, %v1519
        %v1600 = vpack.c.b16 %v1528, %v1520
        %v1601 = vpack.c.b16 %v1529, %v1521
        %v1602 = vpack.c.b16 %v1530, %v1522
        %v1603 = vpack.c.b16 %v1539, %v1531
        %v1604 = vpack.c.b16 %v1540, %v1532
        %v1605 = vpack.c.b16 %v1541, %v1533
        %v1606 = vpack.c.b16 %v1542, %v1534
        %v1607 = vpack.c.b16 %v1543, %v1535
        %v1608 = vpack.c.b16 %v1544, %v1536
        %v1609 = vpack.c.b16 %v1545, %v1537
        %v1610 = vpack.c.b16 %v1546, %v1538
        %1675 = vmatprep.subr.bf16.mxu0 %v1548
        %1676 = vmatpush1.bf16.msra.mxu0 %v1547
        %1677 = vmatprep.subr.bf16.mxu0 %v1556
        %1678 = vmatpush1.bf16.msra.mxu0 %v1555
        %1679 = vmatprep.subr.bf16.mxu0 %v1564
        %1680 = vmatpush1.bf16.msra.mxu0 %v1563
        %1681 = vmatprep.subr.bf16.mxu0 %v1572
        %1682 = vmatpush1.bf16.msra.mxu0 %v1571
        %1683 = vmatprep.subr.bf16.mxu0 %v1580
        %1684 = vmatpush1.bf16.msra.mxu0 %v1579
        %1685 = vmatprep.subr.bf16.mxu0 %v1588
        %1686 = vmatpush1.bf16.msra.mxu0 %v1587
        %1687 = vmatprep.subr.bf16.mxu0 %v1596
        %1688 = vmatpush1.bf16.msra.mxu0 %v1595
        %1689 = vmatprep.subr.bf16.mxu0 %v1604
        %1690 = vmatpush1.bf16.msra.mxu0 %v1603
        %1691 = vmatprep.subr.bf16.mxu0 0
        %1692 = vmatpush1.bf16.msra.mxu0 0
        %1693 = vmatprep.subr.bf16.mxu0 0
        %1694 = vmatpush1.bf16.msra.mxu0 0
        %1695 = vmatprep.subr.bf16.mxu0 0
        %1696 = vmatpush1.bf16.msra.mxu0 0
        %1697 = vmatprep.subr.bf16.mxu0 0
        %1698 = vmatpush1.bf16.msra.mxu0 0
        %1699 = vmatprep.subr.bf16.mxu0 0
        %1700 = vmatpush1.bf16.msra.mxu0 0
        %1701 = vmatprep.subr.bf16.mxu0 0
        %1702 = vmatpush1.bf16.msra.mxu0 0
        %1703 = vmatprep.subr.bf16.mxu0 0
        %1704 = vmatpush1.bf16.msra.mxu0 0
        %1705 = vmatprep.subr.bf16.mxu0 0
        %1706 = vmatpush1.bf16.msra.mxu0 0
        %1707 = vmatprep.mubr.bf16.mxu0 0
        %1708 = vmatmul.mubr.bf16.gmra.mrb[0].mxu0 %v1248
        %v1709 = vpop.f32.mrb[0].mxu0
        %v1710 = vadd.f32 %v1318, %v1709
        %v1711 = vpop.f32.mrb[0].mxu0
        %v1712 = vadd.f32 %v1322, %v1711
        %v1713 = vpop.f32.mrb[0].mxu0
        %v1714 = vpop.f32.mrb[0].mxu0
        %1715 = vdwg.mxu0
        %1716 = vmatprep.subr.bf16.mxu0 %v1550
        %1717 = vmatpush1.bf16.msra.mxu0 %v1549
        %1718 = vmatprep.subr.bf16.mxu0 %v1558
        %1719 = vmatpush1.bf16.msra.mxu0 %v1557
        %1720 = vmatprep.subr.bf16.mxu0 %v1566
        %1721 = vmatpush1.bf16.msra.mxu0 %v1565
        %1722 = vmatprep.subr.bf16.mxu0 %v1574
        %1723 = vmatpush1.bf16.msra.mxu0 %v1573
        %1724 = vmatprep.subr.bf16.mxu0 %v1582
        %1725 = vmatpush1.bf16.msra.mxu0 %v1581
        %1726 = vmatprep.subr.bf16.mxu0 %v1590
        %1727 = vmatpush1.bf16.msra.mxu0 %v1589
        %1728 = vmatprep.subr.bf16.mxu0 %v1598
        %1729 = vmatpush1.bf16.msra.mxu0 %v1597
        %1730 = vmatprep.subr.bf16.mxu0 %v1606
        %1731 = vmatpush1.bf16.msra.mxu0 %v1605
        %1732 = vmatprep.subr.bf16.mxu0 0
        %1733 = vmatpush1.bf16.msra.mxu0 0
        %1734 = vmatprep.subr.bf16.mxu0 0
        %1735 = vmatpush1.bf16.msra.mxu0 0
        %1736 = vmatprep.subr.bf16.mxu0 0
        %1737 = vmatpush1.bf16.msra.mxu0 0
        %1738 = vmatprep.subr.bf16.mxu0 0
        %1739 = vmatpush1.bf16.msra.mxu0 0
        %1740 = vmatprep.subr.bf16.mxu0 0
        %1741 = vmatpush1.bf16.msra.mxu0 0
        %1742 = vmatprep.subr.bf16.mxu0 0
        %1743 = vmatpush1.bf16.msra.mxu0 0
        %1744 = vmatprep.subr.bf16.mxu0 0
        %1745 = vmatpush1.bf16.msra.mxu0 0
        %1746 = vmatprep.subr.bf16.mxu0 0
        %1747 = vmatpush1.bf16.msra.mxu0 0
        %1748 = vmatprep.mubr.bf16.mxu0 0
        %1749 = vmatmul.mubr.bf16.gmra.mrb[0].mxu0 %v1248
        %v1750 = vpop.f32.mrb[0].mxu0
        %v1751 = vadd.f32 %v1326, %v1750
        %v1752 = vpop.f32.mrb[0].mxu0
        %v1753 = vadd.f32 %v1330, %v1752
        %v1754 = vpop.f32.mrb[0].mxu0
        %v1755 = vpop.f32.mrb[0].mxu0
        %1756 = vdwg.mxu0
        %1757 = vmatprep.subr.bf16.mxu0 %v1552
        %1758 = vmatpush1.bf16.msra.mxu0 %v1551
        %1759 = vmatprep.subr.bf16.mxu0 %v1560
        %1760 = vmatpush1.bf16.msra.mxu0 %v1559
        %1761 = vmatprep.subr.bf16.mxu0 %v1568
        %1762 = vmatpush1.bf16.msra.mxu0 %v1567
        %1763 = vmatprep.subr.bf16.mxu0 %v1576
        %1764 = vmatpush1.bf16.msra.mxu0 %v1575
        %1765 = vmatprep.subr.bf16.mxu0 %v1584
        %1766 = vmatpush1.bf16.msra.mxu0 %v1583
        %1767 = vmatprep.subr.bf16.mxu0 %v1592
        %1768 = vmatpush1.bf16.msra.mxu0 %v1591
        %1769 = vmatprep.subr.bf16.mxu0 %v1600
        %1770 = vmatpush1.bf16.msra.mxu0 %v1599
        %1771 = vmatprep.subr.bf16.mxu0 %v1608
        %1772 = vmatpush1.bf16.msra.mxu0 %v1607
        %1773 = vmatprep.subr.bf16.mxu0 0
        %1774 = vmatpush1.bf16.msra.mxu0 0
        %1775 = vmatprep.subr.bf16.mxu0 0
        %1776 = vmatpush1.bf16.msra.mxu0 0
        %1777 = vmatprep.subr.bf16.mxu0 0
        %1778 = vmatpush1.bf16.msra.mxu0 0
        %1779 = vmatprep.subr.bf16.mxu0 0
        %1780 = vmatpush1.bf16.msra.mxu0 0
        %1781 = vmatprep.subr.bf16.mxu0 0
        %1782 = vmatpush1.bf16.msra.mxu0 0
        %1783 = vmatprep.subr.bf16.mxu0 0
        %1784 = vmatpush1.bf16.msra.mxu0 0
        %1785 = vmatprep.subr.bf16.mxu0 0
        %1786 = vmatpush1.bf16.msra.mxu0 0
        %1787 = vmatprep.subr.bf16.mxu0 0
        %1788 = vmatpush1.bf16.msra.mxu0 0
        %1789 = vmatprep.mubr.bf16.mxu0 0
        %1790 = vmatmul.mubr.bf16.gmra.mrb[0].mxu0 %v1248
        %v1791 = vpop.f32.mrb[0].mxu0
        %v1792 = vadd.f32 %v1334, %v1791
        %v1793 = vpop.f32.mrb[0].mxu0
        %v1794 = vadd.f32 %v1338, %v1793
        %v1795 = vpop.f32.mrb[0].mxu0
        %v1796 = vpop.f32.mrb[0].mxu0
        %1797 = vdwg.mxu0
        %1798 = vmatprep.subr.bf16.mxu0 %v1554
        %1799 = vmatpush1.bf16.msra.mxu0 %v1553
        %1800 = vmatprep.subr.bf16.mxu0 %v1562
        %1801 = vmatpush1.bf16.msra.mxu0 %v1561
        %1802 = vmatprep.subr.bf16.mxu0 %v1570
        %1803 = vmatpush1.bf16.msra.mxu0 %v1569
        %1804 = vmatprep.subr.bf16.mxu0 %v1578
        %1805 = vmatpush1.bf16.msra.mxu0 %v1577
        %1806 = vmatprep.subr.bf16.mxu0 %v1586
        %1807 = vmatpush1.bf16.msra.mxu0 %v1585
        %1808 = vmatprep.subr.bf16.mxu0 %v1594
        %1809 = vmatpush1.bf16.msra.mxu0 %v1593
        %1810 = vmatprep.subr.bf16.mxu0 %v1602
        %1811 = vmatpush1.bf16.msra.mxu0 %v1601
        %1812 = vmatprep.subr.bf16.mxu0 %v1610
        %1813 = vmatpush1.bf16.msra.mxu0 %v1609
        %1814 = vmatprep.subr.bf16.mxu0 0
        %1815 = vmatpush1.bf16.msra.mxu0 0
        %1816 = vmatprep.subr.bf16.mxu0 0
        %1817 = vmatpush1.bf16.msra.mxu0 0
        %1818 = vmatprep.subr.bf16.mxu0 0
        %1819 = vmatpush1.bf16.msra.mxu0 0
        %1820 = vmatprep.subr.bf16.mxu0 0
        %1821 = vmatpush1.bf16.msra.mxu0 0
        %1822 = vmatprep.subr.bf16.mxu0 0
        %1823 = vmatpush1.bf16.msra.mxu0 0
        %1824 = vmatprep.subr.bf16.mxu0 0
        %1825 = vmatpush1.bf16.msra.mxu0 0
        %1826 = vmatprep.subr.bf16.mxu0 0
        %1827 = vmatpush1.bf16.msra.mxu0 0
        %1828 = vmatprep.subr.bf16.mxu0 0
        %1829 = vmatpush1.bf16.msra.mxu0 0
        %1830 = vmatprep.mubr.bf16.mxu0 0
        %1831 = vmatmul.mubr.bf16.gmra.mrb[0].mxu0 %v1248
        %v1832 = vpop.f32.mrb[0].mxu0
        %v1833 = vadd.f32 %v1342, %v1832
        %v1834 = vpop.f32.mrb[0].mxu0
        %v1835 = vadd.f32 %v1346, %v1834
        %v1836 = vpop.f32.mrb[0].mxu0
        %v1837 = vpop.f32.mrb[0].mxu0
        %1838 = vdwg.mxu0
        %1839 = vst [vmem:[%s400] sm:$0xff] %v1710
        %1840 = vst [vmem:[%s400 + $0x8] sm:$0xff] %v1712
        %1841 = vst [vmem:[%s400 + $0x10] sm:$0xff] %v1751
        %1842 = vst [vmem:[%s400 + $0x18] sm:$0xff] %v1753
        %1843 = vst [vmem:[%s400 + $0x20] sm:$0xff] %v1792
        %1844 = vst [vmem:[%s400 + $0x28] sm:$0xff] %v1794
        %1845 = vst [vmem:[%s400 + $0x30] sm:$0xff] %v1833
        %1846 = vst [vmem:[%s400 + $0x38] sm:$0xff] %v1835
        %p1847 = scmp.lt.s32.totalorder %s26, 1
        %s1848 = scalar_select %p1847, %s26, 1
        %s1849 = smul.addr %s1848, 8
        %s1850 = smul.addr %s1849, 8
        %s1851 = scalar_lea.vmem %s8, %s1850
        %s1852 = sand.u32 %s238, 1
        %s1853 = scalar_lea.sflag [#allocation4], %s1852
        %s1854 = sand.u32 %s238, 1
        %s1855 = scalar_lea.vmem [#allocation8], %s1854
        // Predicated region
        $region65: #{mmd_vae_forward.1} parent=51 // pred_check
          %p1856 = pneg %p222
        $region66: #{mmd_vae_forward.1} parent=51 // pred_check_branch
          %1858 = sbr.rel (%p1856) target = $region68
        $region67: #{mmd_vae_forward.1} parent=51 // pred_region
          _
        $region68: #{mmd_vae_forward.1} parent=51 // pred_fallthru
          _
        // Predicated region
        $region69: #{mmd_vae_forward.1} parent=51 // pred_check
          %p1859 = pneg %p248
        $region70: #{mmd_vae_forward.1} parent=51 // pred_check_branch
          %1861 = sbr.rel (%p1859) target = $region72
        $region71: #{mmd_vae_forward.1} parent=51 // pred_region
          %s1863 = ssub.s32 16, 16
          %1864 = vsyncadd %s1853, %s1863
          %s1865 = smul.addr %s26, 16
          %s1866 = scalar_lea.hbm %s9, %s1865
          %s1868 = sshll.u32 %s1855, 4
          %s1869 = int_to_ptr.vmem [resolvable:$true] %s1868
          %1871 = dma.vmem_to_hbm [thread:$0]  %s1869, 16, %s1866, %s1853
        $region72: #{mmd_vae_forward.1} parent=51 // pred_fallthru
          _
      $region52: #{mmd_vae_forward.1} parent=5 // pred_fallthru
        _
      %p1872 = scmp.le.s32.totalorder 2, %s21
      // Predicated region
      $region73: #{mmd_vae_forward.1} parent=5 // pred_check
        %p1873 = pneg %p1872
      $region74: #{mmd_vae_forward.1} parent=5 // pred_check_branch
        %1875 = sbr.rel (%p1873) target = $region76
      $region75: #{mmd_vae_forward.1} parent=5 // pred_region
        %s1876 = ssub.s32 %s21, 2
        // Predicated region
        $region77: #{mmd_vae_forward.1} parent=75 // pred_check
          %p1877 = pneg %p228
        $region78: #{mmd_vae_forward.1} parent=75 // pred_check_branch
          %1879 = sbr.rel (%p1877) target = $region80
        $region79: #{mmd_vae_forward.1} parent=75 // pred_region
          %p1880 = scmp.lt.s32.totalorder %s27, 1
          %s1881 = scalar_select %p1880, %s27, 1
          %s1882 = smul.addr %s1881, 8
          %s1883 = smul.addr %s1882, 8
          %s1884 = scalar_lea.vmem %s8, %s1883
        $region80: #{mmd_vae_forward.1} parent=75 // pred_fallthru
          _
        // Predicated region
        $region81: #{mmd_vae_forward.1} parent=75 // pred_check
          %p1885 = pneg %p254
        $region82: #{mmd_vae_forward.1} parent=75 // pred_check_branch
          %1887 = sbr.rel (%p1885) target = $region84
        $region83: #{mmd_vae_forward.1} parent=75 // pred_region
          %s1888 = sand.u32 %s239, 1
          %s1889 = scalar_lea.sflag [#allocation4], %s1888
          %s1890 = sand.u32 %s239, 1
          %s1891 = scalar_lea.vmem [#allocation8], %s1890
          %1892 = dma.done %s1889, 16
        $region84: #{mmd_vae_forward.1} parent=75 // pred_fallthru
          _
      $region76: #{mmd_vae_forward.1} parent=5 // pred_fallthru
        _
    $region6: #{mmd_vae_forward.1} parent=1 // loop_footer
      %s25 = sadd.s32 1, %s21
    $region7: #{mmd_vae_forward.1} parent=1 // loop_footer_branch
      %20 = sbr.rel target = $region3
    $region8: #{mmd_vae_forward.1} parent=1 // loop_exit
      _
    %1893 = vsyncpa [#allocation3], 1
    %s1894 = scalar_lea.sflag [#allocation3], 1
    %1895 = vsyncpa %s1894, 1
    %1896 = vsyncpa [#allocation6], 1
    %1897 = vsyncpa [#allocation4], 1
    %s1898 = scalar_lea.sflag [#allocation4], 1
    %1899 = vsyncpa %s1898, 1

</llo_original>
